<compile_context>
chip_gen: v7x
topology: tpu7x:2x2x1
jax: 0.10.0
libtpu: 0.0.40
codegen_flags: <defaults>
</compile_context>

<pallas_src>
import jax
import jax.numpy as jnp
from jax.experimental import pallas as pl
from jax.experimental.pallas import tpu as pltpu


# ----------------------------- Pallas kernels --------------------------------


def upsample_conv_kernel(xpad_ref, wp_ref, bias_ref, out_ref):
    """Fused 2x nearest upsample + 3x3 conv for one batch element.

    xpad_ref : (1, H+2, W+2, Cin)  bf16  zero-padded NHWC input image
    wp_ref   : (4, 4*Cin, Cout)    bf16  per-phase tap-stacked conv weights
    bias_ref : (1, Cout)           f32
    out_ref  : (1, 4, H*W, Cout)   f32   per-phase outputs (interleaved outside)
    """
    _, hp, wp_pad, cin = xpad_ref.shape
    h, w = hp - 2, wp_pad - 2
    hw = h * w

    xpad = xpad_ref[0]            # (H+2, W+2, Cin)
    bias = bias_ref[...]          # (1, Cout), broadcasts over HW

    # The 4 phases draw their 2x2 taps from only 9 distinct HxW windows of the
    # padded image; slice/reshape each window once and reuse.
    win = {}
    for r in range(3):
        for c in range(3):
            win[(r, c)] = xpad[r:r + h, c:c + w, :].reshape(hw, cin)

    for pa in range(2):           # output-row phase
        for pb in range(2):       # output-col phase
            phase = 2 * pa + pb
            # Stack the 4 taps along the contraction dim -> K = 4*Cin, so the
            # whole phase conv is a single fat MXU matmul.
            patch = jnp.concatenate(
                [win[(pa + ry, pb + rx)] for ry in range(2) for rx in range(2)],
                axis=-1)                                      # (HW, 4*Cin) bf16
            y = jnp.dot(patch, wp_ref[phase],
                        preferred_element_type=jnp.float32) + bias
            out_ref[0, phase] = y


def upsample_noconv_kernel(x_ref, out_ref):
    """Pure 2x nearest upsample: every phase output equals the input image.

    x_ref   : (1, H*W, C)
    out_ref : (1, 4, H*W, C)
    """
    v = x_ref[0]
    for phase in range(4):
        out_ref[0, phase] = v


# ------------------------------ wrapper ---------------------------------------


def _phase_stacked_weights(w_hwio):
    """(3,3,Cin,Cout) HWIO conv weight -> (4, 4*Cin, Cout) per-phase weights.

    comb[a, t, k] = contribution of original tap k (along one spatial axis) to
    effective 2x2 tap t for output phase a of the 2x nearest upsample.
    """
    cin, cout = w_hwio.shape[2], w_hwio.shape[3]
    comb = jnp.array([[[1., 0., 0.], [0., 1., 1.]],    # phase 0
                      [[1., 1., 0.], [0., 0., 1.]]],   # phase 1
                     jnp.float32)
    wp = jnp.einsum("ayk,bxl,klio->abyxio", comb, comb, w_hwio)
    # Flatten: phase = 2*a + b ; contraction row = (2*ry + rx)*Cin + ci
    return wp.reshape(4, 4 * cin, cout)


def _interleave_phases(out_ph, h, w):
    """(B, 4, H*W, C) phase outputs -> (B, C, 2H, 2W) NCHW."""
    b = out_ph.shape[0]
    c = out_ph.shape[3]
    out = out_ph.reshape(b, 2, 2, h, w, c)          # (b, pa, pb, i, j, c)
    out = out.transpose(0, 3, 1, 4, 2, 5)           # (b, i, pa, j, pb, c)
    out = out.reshape(b, 2 * h, 2 * w, c)           # (b, 2H, 2W, c)
    return jnp.transpose(out, (0, 3, 1, 2))         # NHWC -> NCHW


def upsample_pallas(x_nchw, conv_w=None, conv_b=None, *, with_conv=True):
    """Upsample.forward.  x: (B, C, H, W) f32 -> (B, C, 2H, 2W) f32.

    conv_w is HWIO (3, 3, Cin, Cout); a PyTorch OIHW weight maps via
    w.transpose(2, 3, 1, 0).  conv_b is (Cout,).
    """
    B, C, H, W = x_nchw.shape
    HW = H * W
    x_nhwc = jnp.transpose(x_nchw, (0, 2, 3, 1))

    cparams = pltpu.CompilerParams(
        dimension_semantics=("parallel",),
        vmem_limit_bytes=32 * 1024 * 1024,
    )

    if not with_conv:
        x_flat = x_nhwc.reshape(B, HW, C)           # HW-flatten in the wrapper
        out_ph = pl.pallas_call(
            upsample_noconv_kernel,
            out_shape=jax.ShapeDtypeStruct((B, 4, HW, C), x_flat.dtype),
            grid_spec=pltpu.PrefetchScalarGridSpec(
                num_scalar_prefetch=0,
                grid=(B,),
                in_specs=[pl.BlockSpec((1, HW, C), lambda i: (i, 0, 0))],
                out_specs=pl.BlockSpec((1, 4, HW, C), lambda i: (i, 0, 0, 0)),
            ),
            compiler_params=cparams,
        )(x_flat)
        return _interleave_phases(out_ph, H, W)

    Cout = conv_w.shape[3]
    # Zero-pad once in HBM (XLA): no in-kernel halo zeroing or misaligned pad
    # writes.  Cast matmul operands to bf16; accumulate in f32.
    x_pad = jnp.pad(x_nhwc, ((0, 0), (1, 1), (1, 1), (0, 0))).astype(jnp.bfloat16)
    wp = _phase_stacked_weights(conv_w).astype(jnp.bfloat16)    # (4, 4C, Cout)
    bias = conv_b.astype(jnp.float32)[None, :]                  # (1, Cout)

    # TODO(synk): at production shapes (large H*W*C) add an H-tiling grid axis
    # with a 1-row halo and pl.Buffered(1) on the constant-index weight specs
    # to respect v5e/v7x VMEM budgets; unnecessary at these sizes.
    out_ph = pl.pallas_call(
        upsample_conv_kernel,
        out_shape=jax.ShapeDtypeStruct((B, 4, HW, Cout), jnp.float32),
        grid_spec=pltpu.PrefetchScalarGridSpec(
            num_scalar_prefetch=0,
            grid=(B,),
            in_specs=[
                pl.BlockSpec((1, H + 2, W + 2, C), lambda i: (i, 0, 0, 0)),
                pl.BlockSpec((4, 4 * C, Cout), lambda i: (0, 0, 0)),
                pl.BlockSpec((1, Cout), lambda i: (0, 0)),
            ],
            out_specs=pl.BlockSpec((1, 4, HW, Cout), lambda i: (i, 0, 0, 0)),
        ),
        compiler_params=cparams,
    )(x_pad, wp, bias)
    return _interleave_phases(out_ph, H, W)


# --------------------------- pure-JAX reference --------------------------------


def upsample_ref(x_nchw, conv_w=None, conv_b=None, *, with_conv=True):
    u = jnp.repeat(jnp.repeat(x_nchw, 2, axis=2), 2, axis=3)   # nearest, x2
    if with_conv:
        w_oihw = jnp.transpose(conv_w, (3, 2, 0, 1))
        u = jax.lax.conv_general_dilated(
            u, w_oihw, window_strides=(1, 1), padding=((1, 1), (1, 1)),
            dimension_numbers=("NCHW", "OIHW", "NCHW"),
            precision=jax.lax.Precision.HIGHEST)
        u = u + conv_b[None, :, None, None]
    return u


# ---------------------------------- main ---------------------------------------


if __name__ == "__main__":
    B, C, H, W = 2, 128, 8, 8

    key = jax.random.PRNGKey(0)
    kx, kw, kb = jax.random.split(key, 3)
    x = jax.random.normal(kx, (B, C, H, W), jnp.float32)
    conv_w = 0.05 * jax.random.normal(kw, (3, 3, C, C), jnp.float32)   # HWIO
    conv_b = 0.05 * jax.random.normal(kb, (C,), jnp.float32)

    # with_conv=True: fused nearest-upsample + 3x3 conv
    out = jax.block_until_ready(upsample_pallas(x, conv_w, conv_b, with_conv=True))
    ref = jax.block_until_ready(upsample_ref(x, conv_w, conv_b, with_conv=True))
    assert out.shape == (B, C, 2 * H, 2 * W), out.shape
    err = float(jnp.max(jnp.abs(out - ref)))
    assert err < 5e-2, f"with_conv=True max abs err too large: {err}"

    # with_conv=False: pure nearest-neighbour upsample
    out_nc = jax.block_until_ready(upsample_pallas(x, with_conv=False))
    ref_nc = jax.block_until_ready(upsample_ref(x, with_conv=False))
    assert out_nc.shape == (B, C, 2 * H, 2 * W), out_nc.shape
    err_nc = float(jnp.max(jnp.abs(out_nc - ref_nc)))
    assert err_nc < 1e-6, f"with_conv=False mismatch: {err_nc}"

    print("KERNEL_OK")
</pallas_src>

<mosaic_0001>
module attributes {stable_mosaic.version = 11 : i64} {
  func.func @upsample_conv_kernel(%arg0: i32, %arg1: memref<1x10x10x128xbf16, #tpu.memory_space<vmem>>, %arg2: memref<4x512x128xbf16, #tpu.memory_space<vmem>>, %arg3: memref<1x128xf32, #tpu.memory_space<vmem>>, %arg4: memref<1x4x64x128xf32, #tpu.memory_space<vmem>>) attributes {dimension_semantics = [#tpu.dimension_semantics<parallel>], iteration_bounds = array<i64: 2>, scalar_prefetch = 0 : i64, scratch_operands = 0 : i64, tpu.core_type = #tpu.core_type<tc>, window_params = [{transform_indices = @transform_0, window_bounds = array<i64: 1, 10, 10, 128>}, {pipeline_mode = #tpu.pipeline_mode<synchronous>, transform_indices = @transform_1, window_bounds = array<i64: 4, 512, 128>}, {pipeline_mode = #tpu.pipeline_mode<synchronous>, transform_indices = @transform_2, window_bounds = array<i64: 1, 128>}, {transform_indices = @transform_3, window_bounds = array<i64: 1, 4, 64, 128>}]} {
    %c0 = arith.constant 0 : index
    %c0_0 = arith.constant 0 : index
    %c0_1 = arith.constant 0 : index
    %c0_2 = arith.constant 0 : index
    %0 = vector.load %arg1[%c0, %c0_0, %c0_1, %c0_2] : memref<1x10x10x128xbf16, #tpu.memory_space<vmem>>, vector<1x10x10x128xbf16>
    %1 = vector.shape_cast %0 : vector<1x10x10x128xbf16> to vector<10x10x128xbf16>
    %c0_3 = arith.constant 0 : index
    %c0_4 = arith.constant 0 : index
    %2 = vector.load %arg3[%c0_3, %c0_4] : memref<1x128xf32, #tpu.memory_space<vmem>>, vector<1x128xf32>
    %3 = vector.extract_strided_slice %1 {offsets = [0, 0, 0], sizes = [8, 8, 128], strides = [1, 1, 1]} : vector<10x10x128xbf16> to vector<8x8x128xbf16>
    %4 = vector.shape_cast %3 : vector<8x8x128xbf16> to vector<64x128xbf16>
    %5 = vector.extract_strided_slice %1 {offsets = [0, 1, 0], sizes = [8, 8, 128], strides = [1, 1, 1]} : vector<10x10x128xbf16> to vector<8x8x128xbf16>
    %6 = vector.shape_cast %5 : vector<8x8x128xbf16> to vector<64x128xbf16>
    %7 = vector.extract_strided_slice %1 {offsets = [0, 2, 0], sizes = [8, 8, 128], strides = [1, 1, 1]} : vector<10x10x128xbf16> to vector<8x8x128xbf16>
    %8 = vector.shape_cast %7 : vector<8x8x128xbf16> to vector<64x128xbf16>
    %9 = vector.extract_strided_slice %1 {offsets = [1, 0, 0], sizes = [8, 8, 128], strides = [1, 1, 1]} : vector<10x10x128xbf16> to vector<8x8x128xbf16>
    %10 = vector.shape_cast %9 : vector<8x8x128xbf16> to vector<64x128xbf16>
    %11 = vector.extract_strided_slice %1 {offsets = [1, 1, 0], sizes = [8, 8, 128], strides = [1, 1, 1]} : vector<10x10x128xbf16> to vector<8x8x128xbf16>
    %12 = vector.shape_cast %11 : vector<8x8x128xbf16> to vector<64x128xbf16>
    %13 = vector.extract_strided_slice %1 {offsets = [1, 2, 0], sizes = [8, 8, 128], strides = [1, 1, 1]} : vector<10x10x128xbf16> to vector<8x8x128xbf16>
    %14 = vector.shape_cast %13 : vector<8x8x128xbf16> to vector<64x128xbf16>
    %15 = vector.extract_strided_slice %1 {offsets = [2, 0, 0], sizes = [8, 8, 128], strides = [1, 1, 1]} : vector<10x10x128xbf16> to vector<8x8x128xbf16>
    %16 = vector.shape_cast %15 : vector<8x8x128xbf16> to vector<64x128xbf16>
    %17 = vector.extract_strided_slice %1 {offsets = [2, 1, 0], sizes = [8, 8, 128], strides = [1, 1, 1]} : vector<10x10x128xbf16> to vector<8x8x128xbf16>
    %18 = vector.shape_cast %17 : vector<8x8x128xbf16> to vector<64x128xbf16>
    %19 = vector.extract_strided_slice %1 {offsets = [2, 2, 0], sizes = [8, 8, 128], strides = [1, 1, 1]} : vector<10x10x128xbf16> to vector<8x8x128xbf16>
    %20 = vector.shape_cast %19 : vector<8x8x128xbf16> to vector<64x128xbf16>
    %21 = tpu.concatenate %4, %6, %10, %12 in 1 : vector<64x128xbf16>, vector<64x128xbf16>, vector<64x128xbf16>, vector<64x128xbf16> -> vector<64x512xbf16>
    %c0_5 = arith.constant 0 : index
    %c0_6 = arith.constant 0 : index
    %c0_7 = arith.constant 0 : index
    %22 = vector.load %arg2[%c0_5, %c0_6, %c0_7] : memref<4x512x128xbf16, #tpu.memory_space<vmem>>, vector<1x512x128xbf16>
    %23 = vector.shape_cast %22 : vector<1x512x128xbf16> to vector<512x128xbf16>
    %cst = arith.constant dense<0.000000e+00> : vector<64x128xf32>
    %24 = tpu.matmul %21, %23, %cst {dimension_numbers = #tpu.dot_dimension_numbers<[1], [0], [0], [1], [0, 0, 1, 1], [], []>} : vector<64x512xbf16>, vector<512x128xbf16>, vector<64x128xf32> -> vector<64x128xf32>
    %25 = vector.broadcast %2 : vector<1x128xf32> to vector<64x128xf32>
    %26 = arith.addf %24, %25 : vector<64x128xf32>
    %c0_8 = arith.constant 0 : index
    %c0_9 = arith.constant 0 : index
    %c0_10 = arith.constant 0 : index
    %c0_11 = arith.constant 0 : index
    %27 = vector.load %arg4[%c0_8, %c0_9, %c0_10, %c0_11] : memref<1x4x64x128xf32, #tpu.memory_space<vmem>>, vector<1x1x64x128xf32>
    %28 = vector.shape_cast %27 : vector<1x1x64x128xf32> to vector<64x128xf32>
    %29 = vector.shape_cast %26 : vector<64x128xf32> to vector<1x1x64x128xf32>
    tpu.vector_store %arg4[%c0_8, %c0_9, %c0_10, %c0_11], %29 {strides = array<i32>} : memref<1x4x64x128xf32, #tpu.memory_space<vmem>>, vector<1x1x64x128xf32>,
    %30 = tpu.concatenate %6, %8, %12, %14 in 1 : vector<64x128xbf16>, vector<64x128xbf16>, vector<64x128xbf16>, vector<64x128xbf16> -> vector<64x512xbf16>
    %c1 = arith.constant 1 : index
    %c0_12 = arith.constant 0 : index
    %c0_13 = arith.constant 0 : index
    %31 = vector.load %arg2[%c1, %c0_12, %c0_13] : memref<4x512x128xbf16, #tpu.memory_space<vmem>>, vector<1x512x128xbf16>
    %32 = vector.shape_cast %31 : vector<1x512x128xbf16> to vector<512x128xbf16>
    %cst_14 = arith.constant dense<0.000000e+00> : vector<64x128xf32>
    %33 = tpu.matmul %30, %32, %cst_14 {dimension_numbers = #tpu.dot_dimension_numbers<[1], [0], [0], [1], [0, 0, 1, 1], [], []>} : vector<64x512xbf16>, vector<512x128xbf16>, vector<64x128xf32> -> vector<64x128xf32>
    %34 = vector.broadcast %2 : vector<1x128xf32> to vector<64x128xf32>
    %35 = arith.addf %33, %34 : vector<64x128xf32>
    %c0_15 = arith.constant 0 : index
    %c1_16 = arith.constant 1 : index
    %c0_17 = arith.constant 0 : index
    %c0_18 = arith.constant 0 : index
    %36 = vector.load %arg4[%c0_15, %c1_16, %c0_17, %c0_18] : memref<1x4x64x128xf32, #tpu.memory_space<vmem>>, vector<1x1x64x128xf32>
    %37 = vector.shape_cast %36 : vector<1x1x64x128xf32> to vector<64x128xf32>
    %38 = vector.shape_cast %35 : vector<64x128xf32> to vector<1x1x64x128xf32>
    tpu.vector_store %arg4[%c0_15, %c1_16, %c0_17, %c0_18], %38 {strides = array<i32>} : memref<1x4x64x128xf32, #tpu.memory_space<vmem>>, vector<1x1x64x128xf32>,
    %39 = tpu.concatenate %10, %12, %16, %18 in 1 : vector<64x128xbf16>, vector<64x128xbf16>, vector<64x128xbf16>, vector<64x128xbf16> -> vector<64x512xbf16>
    %c2 = arith.constant 2 : index
    %c0_19 = arith.constant 0 : index
    %c0_20 = arith.constant 0 : index
    %40 = vector.load %arg2[%c2, %c0_19, %c0_20] : memref<4x512x128xbf16, #tpu.memory_space<vmem>>, vector<1x512x128xbf16>
    %41 = vector.shape_cast %40 : vector<1x512x128xbf16> to vector<512x128xbf16>
    %cst_21 = arith.constant dense<0.000000e+00> : vector<64x128xf32>
    %42 = tpu.matmul %39, %41, %cst_21 {dimension_numbers = #tpu.dot_dimension_numbers<[1], [0], [0], [1], [0, 0, 1, 1], [], []>} : vector<64x512xbf16>, vector<512x128xbf16>, vector<64x128xf32> -> vector<64x128xf32>
    %43 = vector.broadcast %2 : vector<1x128xf32> to vector<64x128xf32>
    %44 = arith.addf %42, %43 : vector<64x128xf32>
    %c0_22 = arith.constant 0 : index
    %c2_23 = arith.constant 2 : index
    %c0_24 = arith.constant 0 : index
    %c0_25 = arith.constant 0 : index
    %45 = vector.load %arg4[%c0_22, %c2_23, %c0_24, %c0_25] : memref<1x4x64x128xf32, #tpu.memory_space<vmem>>, vector<1x1x64x128xf32>
    %46 = vector.shape_cast %45 : vector<1x1x64x128xf32> to vector<64x128xf32>
    %47 = vector.shape_cast %44 : vector<64x128xf32> to vector<1x1x64x128xf32>
    tpu.vector_store %arg4[%c0_22, %c2_23, %c0_24, %c0_25], %47 {strides = array<i32>} : memref<1x4x64x128xf32, #tpu.memory_space<vmem>>, vector<1x1x64x128xf32>,
    %48 = tpu.concatenate %12, %14, %18, %20 in 1 : vector<64x128xbf16>, vector<64x128xbf16>, vector<64x128xbf16>, vector<64x128xbf16> -> vector<64x512xbf16>
    %c3 = arith.constant 3 : index
    %c0_26 = arith.constant 0 : index
    %c0_27 = arith.constant 0 : index
    %49 = vector.load %arg2[%c3, %c0_26, %c0_27] : memref<4x512x128xbf16, #tpu.memory_space<vmem>>, vector<1x512x128xbf16>
    %50 = vector.shape_cast %49 : vector<1x512x128xbf16> to vector<512x128xbf16>
    %cst_28 = arith.constant dense<0.000000e+00> : vector<64x128xf32>
    %51 = tpu.matmul %48, %50, %cst_28 {dimension_numbers = #tpu.dot_dimension_numbers<[1], [0], [0], [1], [0, 0, 1, 1], [], []>} : vector<64x512xbf16>, vector<512x128xbf16>, vector<64x128xf32> -> vector<64x128xf32>
    %52 = vector.broadcast %2 : vector<1x128xf32> to vector<64x128xf32>
    %53 = arith.addf %51, %52 : vector<64x128xf32>
    %c0_29 = arith.constant 0 : index
    %c3_30 = arith.constant 3 : index
    %c0_31 = arith.constant 0 : index
    %c0_32 = arith.constant 0 : index
    %54 = vector.load %arg4[%c0_29, %c3_30, %c0_31, %c0_32] : memref<1x4x64x128xf32, #tpu.memory_space<vmem>>, vector<1x1x64x128xf32>
    %55 = vector.shape_cast %54 : vector<1x1x64x128xf32> to vector<64x128xf32>
    %56 = vector.shape_cast %53 : vector<64x128xf32> to vector<1x1x64x128xf32>
    tpu.vector_store %arg4[%c0_29, %c3_30, %c0_31, %c0_32], %56 {strides = array<i32>} : memref<1x4x64x128xf32, #tpu.memory_space<vmem>>, vector<1x1x64x128xf32>,
    return
  }
  func.func @transform_0(%arg0: i32) -> (i32, i32, i32, i32) {
    %c0_i32 = arith.constant 0 : i32
    %c0_i32_0 = arith.constant 0 : i32
    %c0_i32_1 = arith.constant 0 : i32
    %c0_i32_2 = arith.constant 0 : i32
    return %arg0, %c0_i32, %c0_i32_0, %c0_i32_1 : i32, i32, i32, i32
  }
  func.func @transform_1(%arg0: i32) -> (i32, i32, i32) {
    %c0_i32 = arith.constant 0 : i32
    %c0_i32_0 = arith.constant 0 : i32
    %c0_i32_1 = arith.constant 0 : i32
    %c0_i32_2 = arith.constant 0 : i32
    return %c0_i32, %c0_i32_0, %c0_i32_1 : i32, i32, i32
  }
  func.func @transform_2(%arg0: i32) -> (i32, i32) {
    %c0_i32 = arith.constant 0 : i32
    %c0_i32_0 = arith.constant 0 : i32
    %c0_i32_1 = arith.constant 0 : i32
    return %c0_i32, %c0_i32_0 : i32, i32
  }
  func.func @transform_3(%arg0: i32) -> (i32, i32, i32, i32) {
    %c0_i32 = arith.constant 0 : i32
    %c0_i32_0 = arith.constant 0 : i32
    %c0_i32_1 = arith.constant 0 : i32
    %c0_i32_2 = arith.constant 0 : i32
    return %arg0, %c0_i32, %c0_i32_0, %c0_i32_1 : i32, i32, i32, i32
  }
}

</mosaic_0001>

<llo_original>
// kernel: tpu_custom_call.1
$region0: #{tpu_custom_call.1}
  #allocation0 [shape = 'u32[]', space=smem, size = 0x4, offset = 0x4, fixed_abs, tag = 'smem constant byte address 0x4 - core index']
  #allocation1 [shape = 'u32[144,128]{1,0:T(1,128)}', space=vmem, size = 0x12000, scoped, tag = 'internal scratch']
  %s0 = inlined_call_operand.vmem [shape: bf16[2,10,10,128], index: 0, kind: input, shape index: {}]
  %s1 = inlined_call_operand.hbm [shape: bf16[4,512,128], index: 1, kind: input, shape index: {}]
  %s2 = inlined_call_operand.vmem [shape: f32[1,128], index: 2, kind: input, shape index: {}]
  %s3 = inlined_call_operand.hbm [shape: f32[2,4,64,128], index: 3, kind: output, shape index: {}]
  %s4 = sld [smem:[#allocation0]]
  $region49: #{tpu_custom_call.1} parent=0
    _
  %s6 = ssub.s32 1, %s4
  %s7 = scalar_select 0, %s6, %s4
  $region1: #{tpu_custom_call.1} parent=0
    #allocation2 [shape = 'u8[524288]{0}', space=vmem, size = 0x80000, scoped, tag = 'input window, operand 1, single buffered']
    #allocation3 [shape = 's32[2]{0}', space=sflag, size = 0x8, scoped, tag = 'scoped memory for tpu_custom_call.1']
    #allocation4 [shape = 's32[2]{0}', space=sflag, size = 0x8, scoped, tag = 'scoped memory for tpu_custom_call.1']
    #allocation5 [shape = 'u8[262144]{0}', space=vmem, size = 0x40000, scoped, tag = 'output window, operand 0']
    %8 = vsyncpa [#allocation3], 0
    %9 = vsyncpa [#allocation4], 0
    %s10 = scalar_lea.sflag [#allocation4], 1
    %11 = vsyncpa %s10, 0
    loop: start=0, step=1, limit=4
    $region2: #{tpu_custom_call.1} parent=1 // loop_pre_header
      _
    $region3: #{tpu_custom_call.1} parent=1 // loop_header
      %s13 = sphi 0, %s17
      %p14 = scmp.ge.s32.totalorder %s13, 4
      %s23 = sphi 0, %s25
      %s26 = sphi 0, %s23
      %s27 = sphi 0, %s26
      %s43 = sphi 0, %s27
      %s47 = sphi 0, %s47
      %s49 = sphi 0, %s47
      %s50 = sphi 0, %s49
      %s64 = sphi 0, %s50
      %s68 = sphi 0, %s68
      %s70 = sphi 0, %s68
      %s71 = sphi 0, %s70
      %s85 = sphi 0, %s71
      %s91 = sphi 0, %s93
      %s94 = sphi 0, %s91
      %s95 = sphi 0, %s94
      %s111 = sphi 0, %s95
    $region4: #{tpu_custom_call.1} parent=1 // loop_header_branch
      %16 = sbr.rel (%p14) target = $region8
    $region5: #{tpu_custom_call.1} parent=1 // loop_body
      %s18 = ssub.s32 %s13, 1
      %s19 = ssub.s32 %s13, 2
      %s20 = sadd.s32 %s13, 1
      %s21 = ssub.s32 %s13, %s20
      %p22 = scmp.eq.s32.totalorder %s21, 0
      %s24 = sadd.s32 %s23, 1
      %s25 = scalar_select %p22, %s23, %s24
      %p28 = pneg %p22
      %p29 = scmp.eq.s32.totalorder %s13, 1
      %p30 = por %p28, %p29
      %p31 = scmp.ne.s32.totalorder %s23, %s26
      %p32 = scmp.eq.s32.totalorder %s13, 0
      %p33 = por %p31, %p32
      %p34 = scmp.ne.s32.totalorder %s23, %s26
      %p35 = scmp.eq.s32.totalorder %s18, 1
      %p36 = por %p34, %p35
      %p37 = scmp.ne.s32.totalorder %s26, %s27
      %p38 = scmp.eq.s32.totalorder %s18, 0
      %p39 = por %p37, %p38
      %p40 = scmp.ne.s32.totalorder %s26, %s27
      %p41 = scmp.eq.s32.totalorder %s19, 1
      %p42 = por %p40, %p41
      %p44 = scmp.ne.s32.totalorder %s27, %s43
      %p45 = scmp.eq.s32.totalorder %s19, 0
      %p46 = por %p44, %p45
      %s48 = sadd.s32 %s47, 1
      %p51 = scmp.eq.s32.totalorder %s13, 1
      %p52 = scmp.ne.s32.totalorder %s47, %s49
      %p53 = scmp.eq.s32.totalorder %s13, 0
      %p54 = por %p52, %p53
      %p55 = scmp.ne.s32.totalorder %s47, %s49
      %p56 = scmp.eq.s32.totalorder %s18, 1
      %p57 = por %p55, %p56
      %p58 = scmp.ne.s32.totalorder %s49, %s50
      %p59 = scmp.eq.s32.totalorder %s18, 0
      %p60 = por %p58, %p59
      %p61 = scmp.ne.s32.totalorder %s49, %s50
      %p62 = scmp.eq.s32.totalorder %s19, 1
      %p63 = por %p61, %p62
      %p65 = scmp.ne.s32.totalorder %s50, %s64
      %p66 = scmp.eq.s32.totalorder %s19, 0
      %p67 = por %p65, %p66
      %s69 = sadd.s32 %s68, 1
      %p72 = scmp.eq.s32.totalorder %s13, 1
      %p73 = scmp.ne.s32.totalorder %s68, %s70
      %p74 = scmp.eq.s32.totalorder %s13, 0
      %p75 = por %p73, %p74
      %p76 = scmp.ne.s32.totalorder %s68, %s70
      %p77 = scmp.eq.s32.totalorder %s18, 1
      %p78 = por %p76, %p77
      %p79 = scmp.ne.s32.totalorder %s70, %s71
      %p80 = scmp.eq.s32.totalorder %s18, 0
      %p81 = por %p79, %p80
      %p82 = scmp.ne.s32.totalorder %s70, %s71
      %p83 = scmp.eq.s32.totalorder %s19, 1
      %p84 = por %p82, %p83
      %p86 = scmp.ne.s32.totalorder %s71, %s85
      %p87 = scmp.eq.s32.totalorder %s19, 0
      %p88 = por %p86, %p87
      %s89 = ssub.s32 %s13, %s20
      %p90 = scmp.eq.s32.totalorder %s89, 0
      %s92 = sadd.s32 %s91, 1
      %s93 = scalar_select %p90, %s91, %s92
      %p96 = pneg %p90
      %p97 = scmp.eq.s32.totalorder %s13, 1
      %p98 = por %p96, %p97
      %p99 = scmp.ne.s32.totalorder %s91, %s94
      %p100 = scmp.eq.s32.totalorder %s13, 0
      %p101 = por %p99, %p100
      %p102 = scmp.ne.s32.totalorder %s91, %s94
      %p103 = scmp.eq.s32.totalorder %s18, 1
      %p104 = por %p102, %p103
      %p105 = scmp.ne.s32.totalorder %s94, %s95
      %p106 = scmp.eq.s32.totalorder %s18, 0
      %p107 = por %p105, %p106
      %p108 = scmp.ne.s32.totalorder %s94, %s95
      %p109 = scmp.eq.s32.totalorder %s19, 1
      %p110 = por %p108, %p109
      %p112 = scmp.ne.s32.totalorder %s95, %s111
      %p113 = scmp.eq.s32.totalorder %s19, 0
      %p114 = por %p112, %p113
      %p115 = scmp.le.s32.totalorder 1, %s13
      %p116 = scmp.lt.s32.totalorder %s13, 3
      %p117 = pnand %p115, %p116
      %p118 = pneg %p117
      // Predicated region
      $region9: #{tpu_custom_call.1} parent=5 // pred_check
        _
      $region10: #{tpu_custom_call.1} parent=5 // pred_check_branch
        %120 = sbr.rel (%p117) target = $region12
      $region11: #{tpu_custom_call.1} parent=5 // pred_region
        %s121 = ssub.s32 %s13, 1
        // Predicated region
        $region13: #{tpu_custom_call.1} parent=11 // pred_check
          %p122 = pneg %p60
        $region14: #{tpu_custom_call.1} parent=11 // pred_check_branch
          %124 = sbr.rel (%p122) target = $region16
        $region15: #{tpu_custom_call.1} parent=11 // pred_region
          %s126 = ssub.s32 16384, 16384
          %127 = vsyncadd [#allocation3], %s126
          %s128 = sshll.u32 [#allocation2], 4
          %s129 = int_to_ptr.vmem [resolvable:$true] %s128
          %134 = dma.hbm_to_vmem [thread:$0]  %s1, 16384, %s129, [#allocation3], 64, 64, 4
        $region16: #{tpu_custom_call.1} parent=11 // pred_fallthru
          _
        // Predicated region
        $region17: #{tpu_custom_call.1} parent=11 // pred_check
          %p135 = pneg %p81
        $region18: #{tpu_custom_call.1} parent=11 // pred_check_branch
          %137 = sbr.rel (%p135) target = $region20
        $region19: #{tpu_custom_call.1} parent=11 // pred_region
          _
        $region20: #{tpu_custom_call.1} parent=11 // pred_fallthru
          _
      $region12: #{tpu_custom_call.1} parent=5 // pred_fallthru
        _
      %p138 = scmp.lt.s32.totalorder %s13, 2
      // Predicated region
      $region21: #{tpu_custom_call.1} parent=5 // pred_check
        %p139 = pneg %p138
      $region22: #{tpu_custom_call.1} parent=5 // pred_check_branch
        %141 = sbr.rel (%p139) target = $region24
      $region23: #{tpu_custom_call.1} parent=5 // pred_region
        // Predicated region
        $region25: #{tpu_custom_call.1} parent=23 // pred_check
          %p142 = pneg %p33
        $region26: #{tpu_custom_call.1} parent=23 // pred_check_branch
          %144 = sbr.rel (%p142) target = $region28
        $region27: #{tpu_custom_call.1} parent=23 // pred_region
          %p145 = scmp.lt.s32.totalorder %s13, 1
          %s146 = scalar_select %p145, %s13, 1
          %s147 = smul.addr %s146, 20
          %s148 = smul.addr %s147, 4
          %s149 = scalar_lea.vmem %s0, %s148
        $region28: #{tpu_custom_call.1} parent=23 // pred_fallthru
          _
      $region24: #{tpu_custom_call.1} parent=5 // pred_fallthru
        _
      %p150 = scmp.le.s32.totalorder 1, %s13
      %p151 = scmp.lt.s32.totalorder %s13, 3
      %p152 = pnand %p150, %p151
      %p153 = pneg %p152
      // Predicated region
      $region29: #{tpu_custom_call.1} parent=5 // pred_check
        _
      $region30: #{tpu_custom_call.1} parent=5 // pred_check_branch
        %155 = sbr.rel (%p152) target = $region32
      $region31: #{tpu_custom_call.1} parent=5 // pred_region
        %s156 = ssub.s32 %s13, 1
        // Predicated region
        $region33: #{tpu_custom_call.1} parent=31 // pred_check
          %p157 = pneg %p60
        $region34: #{tpu_custom_call.1} parent=31 // pred_check_branch
          %159 = sbr.rel (%p157) target = $region36
        $region35: #{tpu_custom_call.1} parent=31 // pred_region
          %160 = dma.done [#allocation3], 16384
        $region36: #{tpu_custom_call.1} parent=31 // pred_fallthru
          _
        %p161 = scmp.lt.s32.totalorder %s18, 1
        %s162 = scalar_select %p161, %s18, 1
        %s163 = smul.addr %s162, 20
        %s164 = smul.addr %s163, 4
        %s165 = scalar_lea.vmem %s0, %s164
        %p166 = pneg %p39
        %p167 = pneg %p36
        %p168 = pneg %p60
        %p169 = pneg %p57
        %p170 = pneg %p81
        %p171 = pneg %p78
        %p172 = pneg %p107
        %p173 = pneg %p104
        %s174 = sand.u32 %s94, 1
        %s175 = scalar_lea.sflag [#allocation4], %s174
        %s176 = sand.u32 %s94, 1
        %s177 = smul.addr %s176, 256
        %s178 = scalar_lea.vmem [#allocation5], %s177
        %p179 = scmp.lt.s32.totalorder %s18, 1
        %s180 = scalar_select %p179, %s18, 1
        %s181 = smul.addr %s180, 20
        %s182 = smul.addr %s181, 4
        %s183 = scalar_lea.vmem %s0, %s182
        %v185 = vld [vmem:[%s183] sm:$0xf]
        %v186 = vld [vmem:[%s183 + $0x4] sm:$0x1]
        %v187 = vld [vmem:[%s183 + $0x8] sm:$0xf]
        %v188 = vld [vmem:[%s183 + $0xc] sm:$0x1]
        %v189 = vld [vmem:[%s183 + $0x10] sm:$0xf]
        %v190 = vld [vmem:[%s183 + $0x14] sm:$0x1]
        %v191 = vld [vmem:[%s183 + $0x18] sm:$0xf]
        %v192 = vld [vmem:[%s183 + $0x1c] sm:$0x1]
        %v193 = vld [vmem:[%s183 + $0x20] sm:$0xf]
        %v194 = vld [vmem:[%s183 + $0x24] sm:$0x1]
        %v195 = vld [vmem:[%s183 + $0x28] sm:$0xf]
        %v196 = vld [vmem:[%s183 + $0x2c] sm:$0x1]
        %v197 = vld [vmem:[%s183 + $0x30] sm:$0xf]
        %v198 = vld [vmem:[%s183 + $0x34] sm:$0x1]
        %v199 = vld [vmem:[%s183 + $0x38] sm:$0xf]
        %v200 = vld [vmem:[%s183 + $0x3c] sm:$0x1]
        %v201 = vld [vmem:[%s183 + $0x40] sm:$0xf]
        %v202 = vld [vmem:[%s183 + $0x44] sm:$0x1]
        %v203 = vld [vmem:[%s183 + $0x48] sm:$0xf]
        %v204 = vld [vmem:[%s183 + $0x4c] sm:$0x1]
        %v205 = vld [vmem:[%s2] sm:$0x1]
        %vm206 = vsmask.f32 3328
        %vm207 = vsmask.f32 7440
        %vm208 = vmor %vm206, %vm207
        %v210 = vshrl.u32 %v185, 16
        %v212 = vrot.slane %v210, 4
        %v213 = vshll.u32 %v185, 16
        %v215 = vrot.slane %v213, 5
        %v216 = vor.u32 %v212, %v215
        %v217 = vrot.slane %v216, 4
        %v219 = vshll.u32 %v186, 16
        %v221 = vrot.slane %v219, 5
        %v222 = vsel %vm208, %v217, %v221
        %v224 = vshrl.u32 %v187, 16
        %v226 = vrot.slane %v224, 4
        %v227 = vshll.u32 %v187, 16
        %v229 = vrot.slane %v227, 5
        %v230 = vor.u32 %v226, %v229
        %v231 = vrot.slane %v230, 4
        %v233 = vshll.u32 %v188, 16
        %v235 = vrot.slane %v233, 5
        %v236 = vsel %vm208, %v231, %v235
        %v238 = vshrl.u32 %v189, 16
        %v240 = vrot.slane %v238, 4
        %v241 = vshll.u32 %v189, 16
        %v243 = vrot.slane %v241, 5
        %v244 = vor.u32 %v240, %v243
        %v245 = vrot.slane %v244, 4
        %v247 = vshll.u32 %v190, 16
        %v249 = vrot.slane %v247, 5
        %v250 = vsel %vm208, %v245, %v249
        %v252 = vshrl.u32 %v191, 16
        %v254 = vrot.slane %v252, 4
        %v255 = vshll.u32 %v191, 16
        %v257 = vrot.slane %v255, 5
        %v258 = vor.u32 %v254, %v257
        %v259 = vrot.slane %v258, 4
        %v261 = vshll.u32 %v192, 16
        %v263 = vrot.slane %v261, 5
        %v264 = vsel %vm208, %v259, %v263
        %v266 = vshrl.u32 %v193, 16
        %v268 = vrot.slane %v266, 4
        %v269 = vshll.u32 %v193, 16
        %v271 = vrot.slane %v269, 5
        %v272 = vor.u32 %v268, %v271
        %v273 = vrot.slane %v272, 4
        %v275 = vshll.u32 %v194, 16
        %v277 = vrot.slane %v275, 5
        %v278 = vsel %vm208, %v273, %v277
        %v280 = vshrl.u32 %v195, 16
        %v282 = vrot.slane %v280, 4
        %v283 = vshll.u32 %v195, 16
        %v285 = vrot.slane %v283, 5
        %v286 = vor.u32 %v282, %v285
        %v287 = vrot.slane %v286, 4
        %v289 = vshll.u32 %v196, 16
        %v291 = vrot.slane %v289, 5
        %v292 = vsel %vm208, %v287, %v291
        %v294 = vshrl.u32 %v197, 16
        %v296 = vrot.slane %v294, 4
        %v297 = vshll.u32 %v197, 16
        %v299 = vrot.slane %v297, 5
        %v300 = vor.u32 %v296, %v299
        %v301 = vrot.slane %v300, 4
        %v303 = vshll.u32 %v198, 16
        %v305 = vrot.slane %v303, 5
        %v306 = vsel %vm208, %v301, %v305
        %v308 = vshrl.u32 %v199, 16
        %v310 = vrot.slane %v308, 4
        %v311 = vshll.u32 %v199, 16
        %v313 = vrot.slane %v311, 5
        %v314 = vor.u32 %v310, %v313
        %v315 = vrot.slane %v314, 4
        %v317 = vshll.u32 %v200, 16
        %v319 = vrot.slane %v317, 5
        %v320 = vsel %vm208, %v315, %v319
        %vm337 = vcmask 1042432
        %vm338 = vcmask 1046532
        %vm339 = vmor %vm337, %vm338
        %v340 = vrot.slane %v185, 5
        %v341 = vrot.slane %v340, 4
        %v342 = vrot.slane %v186, 5
        %v343 = vsel %vm339, %v341, %v342
        %v344 = vrot.slane %v187, 5
        %v345 = vrot.slane %v344, 4
        %v346 = vrot.slane %v188, 5
        %v347 = vsel %vm339, %v345, %v346
        %v348 = vrot.slane %v189, 5
        %v349 = vrot.slane %v348, 4
        %v350 = vrot.slane %v190, 5
        %v351 = vsel %vm339, %v349, %v350
        %v352 = vrot.slane %v191, 5
        %v353 = vrot.slane %v352, 4
        %v354 = vrot.slane %v192, 5
        %v355 = vsel %vm339, %v353, %v354
        %v356 = vrot.slane %v193, 5
        %v357 = vrot.slane %v356, 4
        %v358 = vrot.slane %v194, 5
        %v359 = vsel %vm339, %v357, %v358
        %v360 = vrot.slane %v195, 5
        %v361 = vrot.slane %v360, 4
        %v362 = vrot.slane %v196, 5
        %v363 = vsel %vm339, %v361, %v362
        %v364 = vrot.slane %v197, 5
        %v365 = vrot.slane %v364, 4
        %v366 = vrot.slane %v198, 5
        %v367 = vsel %vm339, %v365, %v366
        %v368 = vrot.slane %v199, 5
        %v369 = vrot.slane %v368, 4
        %v370 = vrot.slane %v200, 5
        %v371 = vsel %vm339, %v369, %v370
        %v373 = vshrl.u32 %v201, 16
        %v375 = vrot.slane %v373, 4
        %v376 = vshll.u32 %v201, 16
        %v378 = vrot.slane %v376, 5
        %v379 = vor.u32 %v375, %v378
        %v380 = vrot.slane %v379, 4
        %v382 = vshll.u32 %v202, 16
        %v384 = vrot.slane %v382, 5
        %v385 = vsel %vm208, %v380, %v384
        %v388 = vrot.slane %v201, 5
        %v389 = vrot.slane %v388, 4
        %v390 = vrot.slane %v202, 5
        %v391 = vsel %vm339, %v389, %v390
        %v393 = vshrl.u32 %v203, 16
        %v395 = vrot.slane %v393, 4
        %v396 = vshll.u32 %v203, 16
        %v398 = vrot.slane %v396, 5
        %v399 = vor.u32 %v395, %v398
        %v400 = vrot.slane %v399, 4
        %v402 = vshll.u32 %v204, 16
        %v404 = vrot.slane %v402, 5
        %v405 = vsel %vm208, %v400, %v404
        %v408 = vrot.slane %v203, 5
        %v409 = vrot.slane %v408, 4
        %v410 = vrot.slane %v204, 5
        %v411 = vsel %vm339, %v409, %v410
        %v412 = vunpack.c.l.b16 %v185
        %v413 = vunpack.c.l.b16 %v187
        %v414 = vunpack.c.l.b16 %v189
        %v415 = vunpack.c.l.b16 %v191
        %v416 = vunpack.c.l.b16 %v193
        %v417 = vunpack.c.l.b16 %v195
        %v418 = vunpack.c.l.b16 %v197
        %v419 = vunpack.c.l.b16 %v199
        %v420 = vpack.c.b16 %v413, %v412
        %v421 = vpack.c.b16 %v415, %v414
        %v422 = vpack.c.b16 %v417, %v416
        %v423 = vpack.c.b16 %v419, %v418
        %v428 = vunpack.c.l.b16 %v222
        %v429 = vunpack.c.l.b16 %v236
        %v430 = vunpack.c.l.b16 %v250
        %v431 = vunpack.c.l.b16 %v264
        %v432 = vunpack.c.l.b16 %v278
        %v433 = vunpack.c.l.b16 %v292
        %v434 = vunpack.c.l.b16 %v306
        %v435 = vunpack.c.l.b16 %v320
        %v436 = vpack.c.b16 %v429, %v428
        %v437 = vpack.c.b16 %v431, %v430
        %v438 = vpack.c.b16 %v433, %v432
        %v439 = vpack.c.b16 %v435, %v434
        %v444 = vunpack.c.l.b16 %v201
        %v445 = vpack.c.b16 %v414, %v413
        %v446 = vpack.c.b16 %v416, %v415
        %v447 = vpack.c.b16 %v418, %v417
        %v448 = vpack.c.b16 %v444, %v419
        %v453 = vunpack.c.l.b16 %v385
        %v454 = vpack.c.b16 %v430, %v429
        %v455 = vpack.c.b16 %v432, %v431
        %v456 = vpack.c.b16 %v434, %v433
        %v457 = vpack.c.b16 %v453, %v435
        %v462 = vld [vmem:[#allocation2] sm:$0xf]
        %v463 = vld [vmem:[#allocation2 + $0x4] sm:$0xf]
        %v464 = vld [vmem:[#allocation2 + $0x8] sm:$0xf]
        %v465 = vld [vmem:[#allocation2 + $0xc] sm:$0xf]
        %v466 = vld [vmem:[#allocation2 + $0x10] sm:$0xf]
        %v467 = vld [vmem:[#allocation2 + $0x14] sm:$0xf]
        %v468 = vld [vmem:[#allocation2 + $0x18] sm:$0xf]
        %v469 = vld [vmem:[#allocation2 + $0x1c] sm:$0xf]
        %v470 = vld [vmem:[#allocation2 + $0x20] sm:$0xf]
        %v471 = vld [vmem:[#allocation2 + $0x24] sm:$0xf]
        %v472 = vld [vmem:[#allocation2 + $0x28] sm:$0xf]
        %v473 = vld [vmem:[#allocation2 + $0x2c] sm:$0xf]
        %v474 = vld [vmem:[#allocation2 + $0x30] sm:$0xf]
        %v475 = vld [vmem:[#allocation2 + $0x34] sm:$0xf]
        %v476 = vld [vmem:[#allocation2 + $0x38] sm:$0xf]
        %v477 = vld [vmem:[#allocation2 + $0x3c] sm:$0xf]
        %v478 = vld [vmem:[#allocation2 + $0x40] sm:$0xf]
        %v479 = vld [vmem:[#allocation2 + $0x44] sm:$0xf]
        %v480 = vld [vmem:[#allocation2 + $0x48] sm:$0xf]
        %v481 = vld [vmem:[#allocation2 + $0x4c] sm:$0xf]
        %v482 = vld [vmem:[#allocation2 + $0x50] sm:$0xf]
        %v483 = vld [vmem:[#allocation2 + $0x54] sm:$0xf]
        %v484 = vld [vmem:[#allocation2 + $0x58] sm:$0xf]
        %v485 = vld [vmem:[#allocation2 + $0x5c] sm:$0xf]
        %v486 = vld [vmem:[#allocation2 + $0x60] sm:$0xf]
        %v487 = vld [vmem:[#allocation2 + $0x64] sm:$0xf]
        %v488 = vld [vmem:[#allocation2 + $0x68] sm:$0xf]
        %v489 = vld [vmem:[#allocation2 + $0x6c] sm:$0xf]
        %v490 = vld [vmem:[#allocation2 + $0x70] sm:$0xf]
        %v491 = vld [vmem:[#allocation2 + $0x74] sm:$0xf]
        %v492 = vld [vmem:[#allocation2 + $0x78] sm:$0xf]
        %v493 = vld [vmem:[#allocation2 + $0x7c] sm:$0xf]
        %v494 = vld [vmem:[#allocation2 + $0x80] sm:$0xf]
        %v495 = vld [vmem:[#allocation2 + $0x84] sm:$0xf]
        %v496 = vld [vmem:[#allocation2 + $0x88] sm:$0xf]
        %v497 = vld [vmem:[#allocation2 + $0x8c] sm:$0xf]
        %v498 = vld [vmem:[#allocation2 + $0x90] sm:$0xf]
        %v499 = vld [vmem:[#allocation2 + $0x94] sm:$0xf]
        %v500 = vld [vmem:[#allocation2 + $0x98] sm:$0xf]
        %v501 = vld [vmem:[#allocation2 + $0x9c] sm:$0xf]
        %v502 = vld [vmem:[#allocation2 + $0xa0] sm:$0xf]
        %v503 = vld [vmem:[#allocation2 + $0xa4] sm:$0xf]
        %v504 = vld [vmem:[#allocation2 + $0xa8] sm:$0xf]
        %v505 = vld [vmem:[#allocation2 + $0xac] sm:$0xf]
        %v506 = vld [vmem:[#allocation2 + $0xb0] sm:$0xf]
        %v507 = vld [vmem:[#allocation2 + $0xb4] sm:$0xf]
        %v508 = vld [vmem:[#allocation2 + $0xb8] sm:$0xf]
        %v509 = vld [vmem:[#allocation2 + $0xbc] sm:$0xf]
        %v510 = vld [vmem:[#allocation2 + $0xc0] sm:$0xf]
        %v511 = vld [vmem:[#allocation2 + $0xc4] sm:$0xf]
        %v512 = vld [vmem:[#allocation2 + $0xc8] sm:$0xf]
        %v513 = vld [vmem:[#allocation2 + $0xcc] sm:$0xf]
        %v514 = vld [vmem:[#allocation2 + $0xd0] sm:$0xf]
        %v515 = vld [vmem:[#allocation2 + $0xd4] sm:$0xf]
        %v516 = vld [vmem:[#allocation2 + $0xd8] sm:$0xf]
        %v517 = vld [vmem:[#allocation2 + $0xdc] sm:$0xf]
        %v518 = vld [vmem:[#allocation2 + $0xe0] sm:$0xf]
        %v519 = vld [vmem:[#allocation2 + $0xe4] sm:$0xf]
        %v520 = vld [vmem:[#allocation2 + $0xe8] sm:$0xf]
        %v521 = vld [vmem:[#allocation2 + $0xec] sm:$0xf]
        %v522 = vld [vmem:[#allocation2 + $0xf0] sm:$0xf]
        %v523 = vld [vmem:[#allocation2 + $0xf4] sm:$0xf]
        %v524 = vld [vmem:[#allocation2 + $0xf8] sm:$0xf]
        %v525 = vld [vmem:[#allocation2 + $0xfc] sm:$0xf]
        %v527 = vlaneseq
        %v528 = vshrl.u32 %v527, 7
        %v529 = vsub.s32 0, %v528
        %v530 = vrot.slane %v205, %v529
        %v596 = vunpack.c.l.b16 %v462
        %v597 = vunpack.c.l.b16 %v463
        %v598 = vunpack.c.l.b16 %v464
        %v599 = vunpack.c.l.b16 %v465
        %v600 = vunpack.c.l.b16 %v466
        %v601 = vunpack.c.l.b16 %v467
        %v602 = vunpack.c.l.b16 %v468
        %v603 = vunpack.c.l.b16 %v469
        %v604 = vunpack.c.l.b16 %v470
        %v605 = vunpack.c.l.b16 %v471
        %v606 = vunpack.c.l.b16 %v472
        %v607 = vunpack.c.l.b16 %v473
        %v608 = vunpack.c.l.b16 %v474
        %v609 = vunpack.c.l.b16 %v475
        %v610 = vunpack.c.l.b16 %v476
        %v611 = vunpack.c.l.b16 %v477
        %v612 = vunpack.c.l.b16 %v478
        %v613 = vunpack.c.l.b16 %v479
        %v614 = vunpack.c.l.b16 %v480
        %v615 = vunpack.c.l.b16 %v481
        %v616 = vunpack.c.l.b16 %v482
        %v617 = vunpack.c.l.b16 %v483
        %v618 = vunpack.c.l.b16 %v484
        %v619 = vunpack.c.l.b16 %v485
        %v620 = vunpack.c.l.b16 %v486
        %v621 = vunpack.c.l.b16 %v487
        %v622 = vunpack.c.l.b16 %v488
        %v623 = vunpack.c.l.b16 %v489
        %v624 = vunpack.c.l.b16 %v490
        %v625 = vunpack.c.l.b16 %v491
        %v626 = vunpack.c.l.b16 %v492
        %v627 = vunpack.c.l.b16 %v493
        %v628 = vunpack.c.l.b16 %v494
        %v629 = vunpack.c.l.b16 %v495
        %v630 = vunpack.c.l.b16 %v496
        %v631 = vunpack.c.l.b16 %v497
        %v632 = vunpack.c.l.b16 %v498
        %v633 = vunpack.c.l.b16 %v499
        %v634 = vunpack.c.l.b16 %v500
        %v635 = vunpack.c.l.b16 %v501
        %v636 = vunpack.c.l.b16 %v502
        %v637 = vunpack.c.l.b16 %v503
        %v638 = vunpack.c.l.b16 %v504
        %v639 = vunpack.c.l.b16 %v505
        %v640 = vunpack.c.l.b16 %v506
        %v641 = vunpack.c.l.b16 %v507
        %v642 = vunpack.c.l.b16 %v508
        %v643 = vunpack.c.l.b16 %v509
        %v644 = vunpack.c.l.b16 %v510
        %v645 = vunpack.c.l.b16 %v511
        %v646 = vunpack.c.l.b16 %v512
        %v647 = vunpack.c.l.b16 %v513
        %v648 = vunpack.c.l.b16 %v514
        %v649 = vunpack.c.l.b16 %v515
        %v650 = vunpack.c.l.b16 %v516
        %v651 = vunpack.c.l.b16 %v517
        %v652 = vunpack.c.l.b16 %v518
        %v653 = vunpack.c.l.b16 %v519
        %v654 = vunpack.c.l.b16 %v520
        %v655 = vunpack.c.l.b16 %v521
        %v656 = vunpack.c.l.b16 %v522
        %v657 = vunpack.c.l.b16 %v523
        %v658 = vunpack.c.l.b16 %v524
        %v659 = vunpack.c.l.b16 %v525
        %v660 = vpack.c.b16 %v597, %v596
        %v661 = vpack.c.b16 %v599, %v598
        %v662 = vpack.c.b16 %v601, %v600
        %v663 = vpack.c.b16 %v603, %v602
        %v664 = vpack.c.b16 %v605, %v604
        %v665 = vpack.c.b16 %v607, %v606
        %v666 = vpack.c.b16 %v609, %v608
        %v667 = vpack.c.b16 %v611, %v610
        %v668 = vpack.c.b16 %v613, %v612
        %v669 = vpack.c.b16 %v615, %v614
        %v670 = vpack.c.b16 %v617, %v616
        %v671 = vpack.c.b16 %v619, %v618
        %v672 = vpack.c.b16 %v621, %v620
        %v673 = vpack.c.b16 %v623, %v622
        %v674 = vpack.c.b16 %v625, %v624
        %v675 = vpack.c.b16 %v627, %v626
        %v676 = vpack.c.b16 %v629, %v628
        %v677 = vpack.c.b16 %v631, %v630
        %v678 = vpack.c.b16 %v633, %v632
        %v679 = vpack.c.b16 %v635, %v634
        %v680 = vpack.c.b16 %v637, %v636
        %v681 = vpack.c.b16 %v639, %v638
        %v682 = vpack.c.b16 %v641, %v640
        %v683 = vpack.c.b16 %v643, %v642
        %v684 = vpack.c.b16 %v645, %v644
        %v685 = vpack.c.b16 %v647, %v646
        %v686 = vpack.c.b16 %v649, %v648
        %v687 = vpack.c.b16 %v651, %v650
        %v688 = vpack.c.b16 %v653, %v652
        %v689 = vpack.c.b16 %v655, %v654
        %v690 = vpack.c.b16 %v657, %v656
        %v691 = vpack.c.b16 %v659, %v658
        %724 = vmatprep.subr.bf16.mxu0 0
        %725 = vmatpush1.bf16.msra.mxu0 %v660
        %726 = vmatprep.subr.bf16.mxu0 0
        %727 = vmatpush1.bf16.msra.mxu0 %v661
        %728 = vmatprep.subr.bf16.mxu0 0
        %729 = vmatpush1.bf16.msra.mxu0 %v662
        %730 = vmatprep.subr.bf16.mxu0 0
        %731 = vmatpush1.bf16.msra.mxu0 %v663
        %732 = vmatprep.subr.bf16.mxu0 0
        %733 = vmatpush1.bf16.msra.mxu0 %v664
        %734 = vmatprep.subr.bf16.mxu0 0
        %735 = vmatpush1.bf16.msra.mxu0 %v665
        %736 = vmatprep.subr.bf16.mxu0 0
        %737 = vmatpush1.bf16.msra.mxu0 %v666
        %738 = vmatprep.subr.bf16.mxu0 0
        %739 = vmatpush1.bf16.msra.mxu0 %v667
        %740 = vmatprep.subr.bf16.mxu0 0
        %741 = vmatpush1.bf16.msra.mxu0 %v668
        %742 = vmatprep.subr.bf16.mxu0 0
        %743 = vmatpush1.bf16.msra.mxu0 %v669
        %744 = vmatprep.subr.bf16.mxu0 0
        %745 = vmatpush1.bf16.msra.mxu0 %v670
        %746 = vmatprep.subr.bf16.mxu0 0
        %747 = vmatpush1.bf16.msra.mxu0 %v671
        %748 = vmatprep.subr.bf16.mxu0 0
        %749 = vmatpush1.bf16.msra.mxu0 %v672
        %750 = vmatprep.subr.bf16.mxu0 0
        %751 = vmatpush1.bf16.msra.mxu0 %v673
        %752 = vmatprep.subr.bf16.mxu0 0
        %753 = vmatpush1.bf16.msra.mxu0 %v674
        %754 = vmatprep.subr.bf16.mxu0 0
        %755 = vmatpush1.bf16.msra.mxu0 %v675
        %756 = vmatprep.mubr.bf16.mxu0 %v436
        %757 = vmatmul.mubr.bf16.gmra.mrb[0].mxu0 %v420
        %v758 = vpop.f32.mrb[0].mxu0
        %v759 = vadd.f32 %v530, %v758
        %v760 = vpop.f32.mrb[0].mxu0
        %v761 = vpop.f32.mrb[0].mxu0
        %v762 = vadd.f32 %v530, %v761
        %v763 = vpop.f32.mrb[0].mxu0
        %764 = vmatprep.mubr.bf16.mxu0 %v437
        %765 = vmatmul.mubr.bf16.gmra.mrb[0].mxu0 %v421
        %v766 = vpop.f32.mrb[0].mxu0
        %v767 = vadd.f32 %v530, %v766
        %v768 = vpop.f32.mrb[0].mxu0
        %v769 = vpop.f32.mrb[0].mxu0
        %v770 = vadd.f32 %v530, %v769
        %v771 = vpop.f32.mrb[0].mxu0
        %772 = vmatprep.mubr.bf16.mxu0 %v438
        %773 = vmatmul.mubr.bf16.gmra.mrb[0].mxu0 %v422
        %v774 = vpop.f32.mrb[0].mxu0
        %v775 = vadd.f32 %v530, %v774
        %v776 = vpop.f32.mrb[0].mxu0
        %v777 = vpop.f32.mrb[0].mxu0
        %v778 = vadd.f32 %v530, %v777
        %v779 = vpop.f32.mrb[0].mxu0
        %780 = vmatprep.mubr.bf16.mxu0 %v439
        %781 = vmatmul.mubr.bf16.gmra.mrb[0].mxu0 %v423
        %v782 = vpop.f32.mrb[0].mxu0
        %v783 = vadd.f32 %v530, %v782
        %v784 = vpop.f32.mrb[0].mxu0
        %v785 = vpop.f32.mrb[0].mxu0
        %v786 = vadd.f32 %v530, %v785
        %v787 = vpop.f32.mrb[0].mxu0
        %788 = vdwg.mxu0
        %789 = vmatprep.subr.bf16.mxu0 0
        %790 = vmatpush1.bf16.msra.mxu0 %v676
        %791 = vmatprep.subr.bf16.mxu0 0
        %792 = vmatpush1.bf16.msra.mxu0 %v677
        %793 = vmatprep.subr.bf16.mxu0 0
        %794 = vmatpush1.bf16.msra.mxu0 %v678
        %795 = vmatprep.subr.bf16.mxu0 0
        %796 = vmatpush1.bf16.msra.mxu0 %v679
        %797 = vmatprep.subr.bf16.mxu0 0
        %798 = vmatpush1.bf16.msra.mxu0 %v680
        %799 = vmatprep.subr.bf16.mxu0 0
        %800 = vmatpush1.bf16.msra.mxu0 %v681
        %801 = vmatprep.subr.bf16.mxu0 0
        %802 = vmatpush1.bf16.msra.mxu0 %v682
        %803 = vmatprep.subr.bf16.mxu0 0
        %804 = vmatpush1.bf16.msra.mxu0 %v683
        %805 = vmatprep.subr.bf16.mxu0 0
        %806 = vmatpush1.bf16.msra.mxu0 %v684
        %807 = vmatprep.subr.bf16.mxu0 0
        %808 = vmatpush1.bf16.msra.mxu0 %v685
        %809 = vmatprep.subr.bf16.mxu0 0
        %810 = vmatpush1.bf16.msra.mxu0 %v686
        %811 = vmatprep.subr.bf16.mxu0 0
        %812 = vmatpush1.bf16.msra.mxu0 %v687
        %813 = vmatprep.subr.bf16.mxu0 0
        %814 = vmatpush1.bf16.msra.mxu0 %v688
        %815 = vmatprep.subr.bf16.mxu0 0
        %816 = vmatpush1.bf16.msra.mxu0 %v689
        %817 = vmatprep.subr.bf16.mxu0 0
        %818 = vmatpush1.bf16.msra.mxu0 %v690
        %819 = vmatprep.subr.bf16.mxu0 0
        %820 = vmatpush1.bf16.msra.mxu0 %v691
        %821 = vmatprep.mubr.bf16.mxu0 %v454
        %822 = vmatmul.mubr.bf16.gmra.mrb[0].mxu0 %v445
        %v823 = vpop.f32.mrb[0].mxu0
        %v824 = vadd.f32 %v759, %v823
        %v825 = vpop.f32.mrb[0].mxu0
        %v826 = vpop.f32.mrb[0].mxu0
        %v827 = vadd.f32 %v762, %v826
        %v828 = vpop.f32.mrb[0].mxu0
        %829 = vmatprep.mubr.bf16.mxu0 %v455
        %830 = vmatmul.mubr.bf16.gmra.mrb[0].mxu0 %v446
        %v831 = vpop.f32.mrb[0].mxu0
        %v832 = vadd.f32 %v767, %v831
        %v833 = vpop.f32.mrb[0].mxu0
        %v834 = vpop.f32.mrb[0].mxu0
        %v835 = vadd.f32 %v770, %v834
        %v836 = vpop.f32.mrb[0].mxu0
        %837 = vmatprep.mubr.bf16.mxu0 %v456
        %838 = vmatmul.mubr.bf16.gmra.mrb[0].mxu0 %v447
        %v839 = vpop.f32.mrb[0].mxu0
        %v840 = vadd.f32 %v775, %v839
        %v841 = vpop.f32.mrb[0].mxu0
        %v842 = vpop.f32.mrb[0].mxu0
        %v843 = vadd.f32 %v778, %v842
        %v844 = vpop.f32.mrb[0].mxu0
        %845 = vmatprep.mubr.bf16.mxu0 %v457
        %846 = vmatmul.mubr.bf16.gmra.mrb[0].mxu0 %v448
        %v847 = vpop.f32.mrb[0].mxu0
        %v848 = vadd.f32 %v783, %v847
        %v849 = vpop.f32.mrb[0].mxu0
        %v850 = vpop.f32.mrb[0].mxu0
        %v851 = vadd.f32 %v786, %v850
        %v852 = vpop.f32.mrb[0].mxu0
        %853 = vdwg.mxu0
        %854 = vst [vmem:[%s178] sm:$0xff] %v824
        %855 = vst [vmem:[%s178 + $0x8] sm:$0xff] %v827
        %856 = vst [vmem:[%s178 + $0x10] sm:$0xff] %v832
        %857 = vst [vmem:[%s178 + $0x18] sm:$0xff] %v835
        %858 = vst [vmem:[%s178 + $0x20] sm:$0xff] %v840
        %859 = vst [vmem:[%s178 + $0x28] sm:$0xff] %v843
        %860 = vst [vmem:[%s178 + $0x30] sm:$0xff] %v848
        %861 = vst [vmem:[%s178 + $0x38] sm:$0xff] %v851
        %v862 = vunpack.c.l.b16 %v343
        %v863 = vunpack.c.l.b16 %v347
        %v864 = vunpack.c.l.b16 %v351
        %v865 = vunpack.c.l.b16 %v355
        %v866 = vunpack.c.l.b16 %v359
        %v867 = vunpack.c.l.b16 %v363
        %v868 = vunpack.c.l.b16 %v367
        %v869 = vunpack.c.l.b16 %v371
        %v870 = vpack.c.b16 %v863, %v862
        %v871 = vpack.c.b16 %v865, %v864
        %v872 = vpack.c.b16 %v867, %v866
        %v873 = vpack.c.b16 %v869, %v868
        %v878 = vunpack.c.l.b16 %v391
        %v879 = vpack.c.b16 %v864, %v863
        %v880 = vpack.c.b16 %v866, %v865
        %v881 = vpack.c.b16 %v868, %v867
        %v882 = vpack.c.b16 %v878, %v869
        %s887 = scalar_lea.vmem [#allocation2], 256
        %v888 = vld [vmem:[%s887] sm:$0xf]
        %v889 = vld [vmem:[%s887 + $0x4] sm:$0xf]
        %v890 = vld [vmem:[%s887 + $0x8] sm:$0xf]
        %v891 = vld [vmem:[%s887 + $0xc] sm:$0xf]
        %v892 = vld [vmem:[%s887 + $0x10] sm:$0xf]
        %v893 = vld [vmem:[%s887 + $0x14] sm:$0xf]
        %v894 = vld [vmem:[%s887 + $0x18] sm:$0xf]
        %v895 = vld [vmem:[%s887 + $0x1c] sm:$0xf]
        %v896 = vld [vmem:[%s887 + $0x20] sm:$0xf]
        %v897 = vld [vmem:[%s887 + $0x24] sm:$0xf]
        %v898 = vld [vmem:[%s887 + $0x28] sm:$0xf]
        %v899 = vld [vmem:[%s887 + $0x2c] sm:$0xf]
        %v900 = vld [vmem:[%s887 + $0x30] sm:$0xf]
        %v901 = vld [vmem:[%s887 + $0x34] sm:$0xf]
        %v902 = vld [vmem:[%s887 + $0x38] sm:$0xf]
        %v903 = vld [vmem:[%s887 + $0x3c] sm:$0xf]
        %v904 = vld [vmem:[%s887 + $0x40] sm:$0xf]
        %v905 = vld [vmem:[%s887 + $0x44] sm:$0xf]
        %v906 = vld [vmem:[%s887 + $0x48] sm:$0xf]
        %v907 = vld [vmem:[%s887 + $0x4c] sm:$0xf]
        %v908 = vld [vmem:[%s887 + $0x50] sm:$0xf]
        %v909 = vld [vmem:[%s887 + $0x54] sm:$0xf]
        %v910 = vld [vmem:[%s887 + $0x58] sm:$0xf]
        %v911 = vld [vmem:[%s887 + $0x5c] sm:$0xf]
        %v912 = vld [vmem:[%s887 + $0x60] sm:$0xf]
        %v913 = vld [vmem:[%s887 + $0x64] sm:$0xf]
        %v914 = vld [vmem:[%s887 + $0x68] sm:$0xf]
        %v915 = vld [vmem:[%s887 + $0x6c] sm:$0xf]
        %v916 = vld [vmem:[%s887 + $0x70] sm:$0xf]
        %v917 = vld [vmem:[%s887 + $0x74] sm:$0xf]
        %v918 = vld [vmem:[%s887 + $0x78] sm:$0xf]
        %v919 = vld [vmem:[%s887 + $0x7c] sm:$0xf]
        %v920 = vld [vmem:[%s887 + $0x80] sm:$0xf]
        %v921 = vld [vmem:[%s887 + $0x84] sm:$0xf]
        %v922 = vld [vmem:[%s887 + $0x88] sm:$0xf]
        %v923 = vld [vmem:[%s887 + $0x8c] sm:$0xf]
        %v924 = vld [vmem:[%s887 + $0x90] sm:$0xf]
        %v925 = vld [vmem:[%s887 + $0x94] sm:$0xf]
        %v926 = vld [vmem:[%s887 + $0x98] sm:$0xf]
        %v927 = vld [vmem:[%s887 + $0x9c] sm:$0xf]
        %v928 = vld [vmem:[%s887 + $0xa0] sm:$0xf]
        %v929 = vld [vmem:[%s887 + $0xa4] sm:$0xf]
        %v930 = vld [vmem:[%s887 + $0xa8] sm:$0xf]
        %v931 = vld [vmem:[%s887 + $0xac] sm:$0xf]
        %v932 = vld [vmem:[%s887 + $0xb0] sm:$0xf]
        %v933 = vld [vmem:[%s887 + $0xb4] sm:$0xf]
        %v934 = vld [vmem:[%s887 + $0xb8] sm:$0xf]
        %v935 = vld [vmem:[%s887 + $0xbc] sm:$0xf]
        %v936 = vld [vmem:[%s887 + $0xc0] sm:$0xf]
        %v937 = vld [vmem:[%s887 + $0xc4] sm:$0xf]
        %v938 = vld [vmem:[%s887 + $0xc8] sm:$0xf]
        %v939 = vld [vmem:[%s887 + $0xcc] sm:$0xf]
        %v940 = vld [vmem:[%s887 + $0xd0] sm:$0xf]
        %v941 = vld [vmem:[%s887 + $0xd4] sm:$0xf]
        %v942 = vld [vmem:[%s887 + $0xd8] sm:$0xf]
        %v943 = vld [vmem:[%s887 + $0xdc] sm:$0xf]
        %v944 = vld [vmem:[%s887 + $0xe0] sm:$0xf]
        %v945 = vld [vmem:[%s887 + $0xe4] sm:$0xf]
        %v946 = vld [vmem:[%s887 + $0xe8] sm:$0xf]
        %v947 = vld [vmem:[%s887 + $0xec] sm:$0xf]
        %v948 = vld [vmem:[%s887 + $0xf0] sm:$0xf]
        %v949 = vld [vmem:[%s887 + $0xf4] sm:$0xf]
        %v950 = vld [vmem:[%s887 + $0xf8] sm:$0xf]
        %v951 = vld [vmem:[%s887 + $0xfc] sm:$0xf]
        %v1016 = vunpack.c.l.b16 %v888
        %v1017 = vunpack.c.l.b16 %v889
        %v1018 = vunpack.c.l.b16 %v890
        %v1019 = vunpack.c.l.b16 %v891
        %v1020 = vunpack.c.l.b16 %v892
        %v1021 = vunpack.c.l.b16 %v893
        %v1022 = vunpack.c.l.b16 %v894
        %v1023 = vunpack.c.l.b16 %v895
        %v1024 = vunpack.c.l.b16 %v896
        %v1025 = vunpack.c.l.b16 %v897
        %v1026 = vunpack.c.l.b16 %v898
        %v1027 = vunpack.c.l.b16 %v899
        %v1028 = vunpack.c.l.b16 %v900
        %v1029 = vunpack.c.l.b16 %v901
        %v1030 = vunpack.c.l.b16 %v902
        %v1031 = vunpack.c.l.b16 %v903
        %v1032 = vunpack.c.l.b16 %v904
        %v1033 = vunpack.c.l.b16 %v905
        %v1034 = vunpack.c.l.b16 %v906
        %v1035 = vunpack.c.l.b16 %v907
        %v1036 = vunpack.c.l.b16 %v908
        %v1037 = vunpack.c.l.b16 %v909
        %v1038 = vunpack.c.l.b16 %v910
        %v1039 = vunpack.c.l.b16 %v911
        %v1040 = vunpack.c.l.b16 %v912
        %v1041 = vunpack.c.l.b16 %v913
        %v1042 = vunpack.c.l.b16 %v914
        %v1043 = vunpack.c.l.b16 %v915
        %v1044 = vunpack.c.l.b16 %v916
        %v1045 = vunpack.c.l.b16 %v917
        %v1046 = vunpack.c.l.b16 %v918
        %v1047 = vunpack.c.l.b16 %v919
        %v1048 = vunpack.c.l.b16 %v920
        %v1049 = vunpack.c.l.b16 %v921
        %v1050 = vunpack.c.l.b16 %v922
        %v1051 = vunpack.c.l.b16 %v923
        %v1052 = vunpack.c.l.b16 %v924
        %v1053 = vunpack.c.l.b16 %v925
        %v1054 = vunpack.c.l.b16 %v926
        %v1055 = vunpack.c.l.b16 %v927
        %v1056 = vunpack.c.l.b16 %v928
        %v1057 = vunpack.c.l.b16 %v929
        %v1058 = vunpack.c.l.b16 %v930
        %v1059 = vunpack.c.l.b16 %v931
        %v1060 = vunpack.c.l.b16 %v932
        %v1061 = vunpack.c.l.b16 %v933
        %v1062 = vunpack.c.l.b16 %v934
        %v1063 = vunpack.c.l.b16 %v935
        %v1064 = vunpack.c.l.b16 %v936
        %v1065 = vunpack.c.l.b16 %v937
        %v1066 = vunpack.c.l.b16 %v938
        %v1067 = vunpack.c.l.b16 %v939
        %v1068 = vunpack.c.l.b16 %v940
        %v1069 = vunpack.c.l.b16 %v941
        %v1070 = vunpack.c.l.b16 %v942
        %v1071 = vunpack.c.l.b16 %v943
        %v1072 = vunpack.c.l.b16 %v944
        %v1073 = vunpack.c.l.b16 %v945
        %v1074 = vunpack.c.l.b16 %v946
        %v1075 = vunpack.c.l.b16 %v947
        %v1076 = vunpack.c.l.b16 %v948
        %v1077 = vunpack.c.l.b16 %v949
        %v1078 = vunpack.c.l.b16 %v950
        %v1079 = vunpack.c.l.b16 %v951
        %v1080 = vpack.c.b16 %v1017, %v1016
        %v1081 = vpack.c.b16 %v1019, %v1018
        %v1082 = vpack.c.b16 %v1021, %v1020
        %v1083 = vpack.c.b16 %v1023, %v1022
        %v1084 = vpack.c.b16 %v1025, %v1024
        %v1085 = vpack.c.b16 %v1027, %v1026
        %v1086 = vpack.c.b16 %v1029, %v1028
        %v1087 = vpack.c.b16 %v1031, %v1030
        %v1088 = vpack.c.b16 %v1033, %v1032
        %v1089 = vpack.c.b16 %v1035, %v1034
        %v1090 = vpack.c.b16 %v1037, %v1036
        %v1091 = vpack.c.b16 %v1039, %v1038
        %v1092 = vpack.c.b16 %v1041, %v1040
        %v1093 = vpack.c.b16 %v1043, %v1042
        %v1094 = vpack.c.b16 %v1045, %v1044
        %v1095 = vpack.c.b16 %v1047, %v1046
        %v1096 = vpack.c.b16 %v1049, %v1048
        %v1097 = vpack.c.b16 %v1051, %v1050
        %v1098 = vpack.c.b16 %v1053, %v1052
        %v1099 = vpack.c.b16 %v1055, %v1054
        %v1100 = vpack.c.b16 %v1057, %v1056
        %v1101 = vpack.c.b16 %v1059, %v1058
        %v1102 = vpack.c.b16 %v1061, %v1060
        %v1103 = vpack.c.b16 %v1063, %v1062
        %v1104 = vpack.c.b16 %v1065, %v1064
        %v1105 = vpack.c.b16 %v1067, %v1066
        %v1106 = vpack.c.b16 %v1069, %v1068
        %v1107 = vpack.c.b16 %v1071, %v1070
        %v1108 = vpack.c.b16 %v1073, %v1072
        %v1109 = vpack.c.b16 %v1075, %v1074
        %v1110 = vpack.c.b16 %v1077, %v1076
        %v1111 = vpack.c.b16 %v1079, %v1078
        %1144 = vmatprep.subr.bf16.mxu0 0
        %1145 = vmatpush1.bf16.msra.mxu0 %v1080
        %1146 = vmatprep.subr.bf16.mxu0 0
        %1147 = vmatpush1.bf16.msra.mxu0 %v1081
        %1148 = vmatprep.subr.bf16.mxu0 0
        %1149 = vmatpush1.bf16.msra.mxu0 %v1082
        %1150 = vmatprep.subr.bf16.mxu0 0
        %1151 = vmatpush1.bf16.msra.mxu0 %v1083
        %1152 = vmatprep.subr.bf16.mxu0 0
        %1153 = vmatpush1.bf16.msra.mxu0 %v1084
        %1154 = vmatprep.subr.bf16.mxu0 0
        %1155 = vmatpush1.bf16.msra.mxu0 %v1085
        %1156 = vmatprep.subr.bf16.mxu0 0
        %1157 = vmatpush1.bf16.msra.mxu0 %v1086
        %1158 = vmatprep.subr.bf16.mxu0 0
        %1159 = vmatpush1.bf16.msra.mxu0 %v1087
        %1160 = vmatprep.subr.bf16.mxu0 0
        %1161 = vmatpush1.bf16.msra.mxu0 %v1088
        %1162 = vmatprep.subr.bf16.mxu0 0
        %1163 = vmatpush1.bf16.msra.mxu0 %v1089
        %1164 = vmatprep.subr.bf16.mxu0 0
        %1165 = vmatpush1.bf16.msra.mxu0 %v1090
        %1166 = vmatprep.subr.bf16.mxu0 0
        %1167 = vmatpush1.bf16.msra.mxu0 %v1091
        %1168 = vmatprep.subr.bf16.mxu0 0
        %1169 = vmatpush1.bf16.msra.mxu0 %v1092
        %1170 = vmatprep.subr.bf16.mxu0 0
        %1171 = vmatpush1.bf16.msra.mxu0 %v1093
        %1172 = vmatprep.subr.bf16.mxu0 0
        %1173 = vmatpush1.bf16.msra.mxu0 %v1094
        %1174 = vmatprep.subr.bf16.mxu0 0
        %1175 = vmatpush1.bf16.msra.mxu0 %v1095
        %1176 = vmatprep.mubr.bf16.mxu0 %v870
        %1177 = vmatmul.mubr.bf16.gmra.mrb[0].mxu0 %v436
        %v1178 = vpop.f32.mrb[0].mxu0
        %v1179 = vadd.f32 %v530, %v1178
        %v1180 = vpop.f32.mrb[0].mxu0
        %v1181 = vpop.f32.mrb[0].mxu0
        %v1182 = vadd.f32 %v530, %v1181
        %v1183 = vpop.f32.mrb[0].mxu0
        %1184 = vmatprep.mubr.bf16.mxu0 %v871
        %1185 = vmatmul.mubr.bf16.gmra.mrb[0].mxu0 %v437
        %v1186 = vpop.f32.mrb[0].mxu0
        %v1187 = vadd.f32 %v530, %v1186
        %v1188 = vpop.f32.mrb[0].mxu0
        %v1189 = vpop.f32.mrb[0].mxu0
        %v1190 = vadd.f32 %v530, %v1189
        %v1191 = vpop.f32.mrb[0].mxu0
        %1192 = vmatprep.mubr.bf16.mxu0 %v872
        %1193 = vmatmul.mubr.bf16.gmra.mrb[0].mxu0 %v438
        %v1194 = vpop.f32.mrb[0].mxu0
        %v1195 = vadd.f32 %v530, %v1194
        %v1196 = vpop.f32.mrb[0].mxu0
        %v1197 = vpop.f32.mrb[0].mxu0
        %v1198 = vadd.f32 %v530, %v1197
        %v1199 = vpop.f32.mrb[0].mxu0
        %1200 = vmatprep.mubr.bf16.mxu0 %v873
        %1201 = vmatmul.mubr.bf16.gmra.mrb[0].mxu0 %v439
        %v1202 = vpop.f32.mrb[0].mxu0
        %v1203 = vadd.f32 %v530, %v1202
        %v1204 = vpop.f32.mrb[0].mxu0
        %v1205 = vpop.f32.mrb[0].mxu0
        %v1206 = vadd.f32 %v530, %v1205
        %v1207 = vpop.f32.mrb[0].mxu0
        %1208 = vdwg.mxu0
        %1209 = vmatprep.subr.bf16.mxu0 0
        %1210 = vmatpush1.bf16.msra.mxu0 %v1096
        %1211 = vmatprep.subr.bf16.mxu0 0
        %1212 = vmatpush1.bf16.msra.mxu0 %v1097
        %1213 = vmatprep.subr.bf16.mxu0 0
        %1214 = vmatpush1.bf16.msra.mxu0 %v1098
        %1215 = vmatprep.subr.bf16.mxu0 0
        %1216 = vmatpush1.bf16.msra.mxu0 %v1099
        %1217 = vmatprep.subr.bf16.mxu0 0
        %1218 = vmatpush1.bf16.msra.mxu0 %v1100
        %1219 = vmatprep.subr.bf16.mxu0 0
        %1220 = vmatpush1.bf16.msra.mxu0 %v1101
        %1221 = vmatprep.subr.bf16.mxu0 0
        %1222 = vmatpush1.bf16.msra.mxu0 %v1102
        %1223 = vmatprep.subr.bf16.mxu0 0
        %1224 = vmatpush1.bf16.msra.mxu0 %v1103
        %1225 = vmatprep.subr.bf16.mxu0 0
        %1226 = vmatpush1.bf16.msra.mxu0 %v1104
        %1227 = vmatprep.subr.bf16.mxu0 0
        %1228 = vmatpush1.bf16.msra.mxu0 %v1105
        %1229 = vmatprep.subr.bf16.mxu0 0
        %1230 = vmatpush1.bf16.msra.mxu0 %v1106
        %1231 = vmatprep.subr.bf16.mxu0 0
        %1232 = vmatpush1.bf16.msra.mxu0 %v1107
        %1233 = vmatprep.subr.bf16.mxu0 0
        %1234 = vmatpush1.bf16.msra.mxu0 %v1108
        %1235 = vmatprep.subr.bf16.mxu0 0
        %1236 = vmatpush1.bf16.msra.mxu0 %v1109
        %1237 = vmatprep.subr.bf16.mxu0 0
        %1238 = vmatpush1.bf16.msra.mxu0 %v1110
        %1239 = vmatprep.subr.bf16.mxu0 0
        %1240 = vmatpush1.bf16.msra.mxu0 %v1111
        %1241 = vmatprep.mubr.bf16.mxu0 %v879
        %1242 = vmatmul.mubr.bf16.gmra.mrb[0].mxu0 %v454
        %v1243 = vpop.f32.mrb[0].mxu0
        %v1244 = vadd.f32 %v1179, %v1243
        %v1245 = vpop.f32.mrb[0].mxu0
        %v1246 = vpop.f32.mrb[0].mxu0
        %v1247 = vadd.f32 %v1182, %v1246
        %v1248 = vpop.f32.mrb[0].mxu0
        %1249 = vmatprep.mubr.bf16.mxu0 %v880
        %1250 = vmatmul.mubr.bf16.gmra.mrb[0].mxu0 %v455
        %v1251 = vpop.f32.mrb[0].mxu0
        %v1252 = vadd.f32 %v1187, %v1251
        %v1253 = vpop.f32.mrb[0].mxu0
        %v1254 = vpop.f32.mrb[0].mxu0
        %v1255 = vadd.f32 %v1190, %v1254
        %v1256 = vpop.f32.mrb[0].mxu0
        %1257 = vmatprep.mubr.bf16.mxu0 %v881
        %1258 = vmatmul.mubr.bf16.gmra.mrb[0].mxu0 %v456
        %v1259 = vpop.f32.mrb[0].mxu0
        %v1260 = vadd.f32 %v1195, %v1259
        %v1261 = vpop.f32.mrb[0].mxu0
        %v1262 = vpop.f32.mrb[0].mxu0
        %v1263 = vadd.f32 %v1198, %v1262
        %v1264 = vpop.f32.mrb[0].mxu0
        %1265 = vmatprep.mubr.bf16.mxu0 %v882
        %1266 = vmatmul.mubr.bf16.gmra.mrb[0].mxu0 %v457
        %v1267 = vpop.f32.mrb[0].mxu0
        %v1268 = vadd.f32 %v1203, %v1267
        %v1269 = vpop.f32.mrb[0].mxu0
        %v1270 = vpop.f32.mrb[0].mxu0
        %v1271 = vadd.f32 %v1206, %v1270
        %v1272 = vpop.f32.mrb[0].mxu0
        %1273 = vdwg.mxu0
        %s1274 = scalar_lea.vmem %s178, 64 [#allocation5]
        %1275 = vst [vmem:[%s1274] sm:$0xff] %v1244
        %1276 = vst [vmem:[%s1274 + $0x8] sm:$0xff] %v1247
        %1277 = vst [vmem:[%s1274 + $0x10] sm:$0xff] %v1252
        %1278 = vst [vmem:[%s1274 + $0x18] sm:$0xff] %v1255
        %1279 = vst [vmem:[%s1274 + $0x20] sm:$0xff] %v1260
        %1280 = vst [vmem:[%s1274 + $0x28] sm:$0xff] %v1263
        %1281 = vst [vmem:[%s1274 + $0x30] sm:$0xff] %v1268
        %1282 = vst [vmem:[%s1274 + $0x38] sm:$0xff] %v1271
        %v1283 = vunpack.c.l.b16 %v203
        %v1284 = vpack.c.b16 %v1283, %v444
        %v1286 = vunpack.c.l.b16 %v405
        %v1287 = vpack.c.b16 %v1286, %v453
        %s1289 = scalar_lea.vmem [#allocation2], 512
        %v1290 = vld [vmem:[%s1289] sm:$0xf]
        %v1291 = vld [vmem:[%s1289 + $0x4] sm:$0xf]
        %v1292 = vld [vmem:[%s1289 + $0x8] sm:$0xf]
        %v1293 = vld [vmem:[%s1289 + $0xc] sm:$0xf]
        %v1294 = vld [vmem:[%s1289 + $0x10] sm:$0xf]
        %v1295 = vld [vmem:[%s1289 + $0x14] sm:$0xf]
        %v1296 = vld [vmem:[%s1289 + $0x18] sm:$0xf]
        %v1297 = vld [vmem:[%s1289 + $0x1c] sm:$0xf]
        %v1298 = vld [vmem:[%s1289 + $0x20] sm:$0xf]
        %v1299 = vld [vmem:[%s1289 + $0x24] sm:$0xf]
        %v1300 = vld [vmem:[%s1289 + $0x28] sm:$0xf]
        %v1301 = vld [vmem:[%s1289 + $0x2c] sm:$0xf]
        %v1302 = vld [vmem:[%s1289 + $0x30] sm:$0xf]
        %v1303 = vld [vmem:[%s1289 + $0x34] sm:$0xf]
        %v1304 = vld [vmem:[%s1289 + $0x38] sm:$0xf]
        %v1305 = vld [vmem:[%s1289 + $0x3c] sm:$0xf]
        %v1306 = vld [vmem:[%s1289 + $0x40] sm:$0xf]
        %v1307 = vld [vmem:[%s1289 + $0x44] sm:$0xf]
        %v1308 = vld [vmem:[%s1289 + $0x48] sm:$0xf]
        %v1309 = vld [vmem:[%s1289 + $0x4c] sm:$0xf]
        %v1310 = vld [vmem:[%s1289 + $0x50] sm:$0xf]
        %v1311 = vld [vmem:[%s1289 + $0x54] sm:$0xf]
        %v1312 = vld [vmem:[%s1289 + $0x58] sm:$0xf]
        %v1313 = vld [vmem:[%s1289 + $0x5c] sm:$0xf]
        %v1314 = vld [vmem:[%s1289 + $0x60] sm:$0xf]
        %v1315 = vld [vmem:[%s1289 + $0x64] sm:$0xf]
        %v1316 = vld [vmem:[%s1289 + $0x68] sm:$0xf]
        %v1317 = vld [vmem:[%s1289 + $0x6c] sm:$0xf]
        %v1318 = vld [vmem:[%s1289 + $0x70] sm:$0xf]
        %v1319 = vld [vmem:[%s1289 + $0x74] sm:$0xf]
        %v1320 = vld [vmem:[%s1289 + $0x78] sm:$0xf]
        %v1321 = vld [vmem:[%s1289 + $0x7c] sm:$0xf]
        %v1322 = vld [vmem:[%s1289 + $0x80] sm:$0xf]
        %v1323 = vld [vmem:[%s1289 + $0x84] sm:$0xf]
        %v1324 = vld [vmem:[%s1289 + $0x88] sm:$0xf]
        %v1325 = vld [vmem:[%s1289 + $0x8c] sm:$0xf]
        %v1326 = vld [vmem:[%s1289 + $0x90] sm:$0xf]
        %v1327 = vld [vmem:[%s1289 + $0x94] sm:$0xf]
        %v1328 = vld [vmem:[%s1289 + $0x98] sm:$0xf]
        %v1329 = vld [vmem:[%s1289 + $0x9c] sm:$0xf]
        %v1330 = vld [vmem:[%s1289 + $0xa0] sm:$0xf]
        %v1331 = vld [vmem:[%s1289 + $0xa4] sm:$0xf]
        %v1332 = vld [vmem:[%s1289 + $0xa8] sm:$0xf]
        %v1333 = vld [vmem:[%s1289 + $0xac] sm:$0xf]
        %v1334 = vld [vmem:[%s1289 + $0xb0] sm:$0xf]
        %v1335 = vld [vmem:[%s1289 + $0xb4] sm:$0xf]
        %v1336 = vld [vmem:[%s1289 + $0xb8] sm:$0xf]
        %v1337 = vld [vmem:[%s1289 + $0xbc] sm:$0xf]
        %v1338 = vld [vmem:[%s1289 + $0xc0] sm:$0xf]
        %v1339 = vld [vmem:[%s1289 + $0xc4] sm:$0xf]
        %v1340 = vld [vmem:[%s1289 + $0xc8] sm:$0xf]
        %v1341 = vld [vmem:[%s1289 + $0xcc] sm:$0xf]
        %v1342 = vld [vmem:[%s1289 + $0xd0] sm:$0xf]
        %v1343 = vld [vmem:[%s1289 + $0xd4] sm:$0xf]
        %v1344 = vld [vmem:[%s1289 + $0xd8] sm:$0xf]
        %v1345 = vld [vmem:[%s1289 + $0xdc] sm:$0xf]
        %v1346 = vld [vmem:[%s1289 + $0xe0] sm:$0xf]
        %v1347 = vld [vmem:[%s1289 + $0xe4] sm:$0xf]
        %v1348 = vld [vmem:[%s1289 + $0xe8] sm:$0xf]
        %v1349 = vld [vmem:[%s1289 + $0xec] sm:$0xf]
        %v1350 = vld [vmem:[%s1289 + $0xf0] sm:$0xf]
        %v1351 = vld [vmem:[%s1289 + $0xf4] sm:$0xf]
        %v1352 = vld [vmem:[%s1289 + $0xf8] sm:$0xf]
        %v1353 = vld [vmem:[%s1289 + $0xfc] sm:$0xf]
        %v1418 = vunpack.c.l.b16 %v1290
        %v1419 = vunpack.c.l.b16 %v1291
        %v1420 = vunpack.c.l.b16 %v1292
        %v1421 = vunpack.c.l.b16 %v1293
        %v1422 = vunpack.c.l.b16 %v1294
        %v1423 = vunpack.c.l.b16 %v1295
        %v1424 = vunpack.c.l.b16 %v1296
        %v1425 = vunpack.c.l.b16 %v1297
        %v1426 = vunpack.c.l.b16 %v1298
        %v1427 = vunpack.c.l.b16 %v1299
        %v1428 = vunpack.c.l.b16 %v1300
        %v1429 = vunpack.c.l.b16 %v1301
        %v1430 = vunpack.c.l.b16 %v1302
        %v1431 = vunpack.c.l.b16 %v1303
        %v1432 = vunpack.c.l.b16 %v1304
        %v1433 = vunpack.c.l.b16 %v1305
        %v1434 = vunpack.c.l.b16 %v1306
        %v1435 = vunpack.c.l.b16 %v1307
        %v1436 = vunpack.c.l.b16 %v1308
        %v1437 = vunpack.c.l.b16 %v1309
        %v1438 = vunpack.c.l.b16 %v1310
        %v1439 = vunpack.c.l.b16 %v1311
        %v1440 = vunpack.c.l.b16 %v1312
        %v1441 = vunpack.c.l.b16 %v1313
        %v1442 = vunpack.c.l.b16 %v1314
        %v1443 = vunpack.c.l.b16 %v1315
        %v1444 = vunpack.c.l.b16 %v1316
        %v1445 = vunpack.c.l.b16 %v1317
        %v1446 = vunpack.c.l.b16 %v1318
        %v1447 = vunpack.c.l.b16 %v1319
        %v1448 = vunpack.c.l.b16 %v1320
        %v1449 = vunpack.c.l.b16 %v1321
        %v1450 = vunpack.c.l.b16 %v1322
        %v1451 = vunpack.c.l.b16 %v1323
        %v1452 = vunpack.c.l.b16 %v1324
        %v1453 = vunpack.c.l.b16 %v1325
        %v1454 = vunpack.c.l.b16 %v1326
        %v1455 = vunpack.c.l.b16 %v1327
        %v1456 = vunpack.c.l.b16 %v1328
        %v1457 = vunpack.c.l.b16 %v1329
        %v1458 = vunpack.c.l.b16 %v1330
        %v1459 = vunpack.c.l.b16 %v1331
        %v1460 = vunpack.c.l.b16 %v1332
        %v1461 = vunpack.c.l.b16 %v1333
        %v1462 = vunpack.c.l.b16 %v1334
        %v1463 = vunpack.c.l.b16 %v1335
        %v1464 = vunpack.c.l.b16 %v1336
        %v1465 = vunpack.c.l.b16 %v1337
        %v1466 = vunpack.c.l.b16 %v1338
        %v1467 = vunpack.c.l.b16 %v1339
        %v1468 = vunpack.c.l.b16 %v1340
        %v1469 = vunpack.c.l.b16 %v1341
        %v1470 = vunpack.c.l.b16 %v1342
        %v1471 = vunpack.c.l.b16 %v1343
        %v1472 = vunpack.c.l.b16 %v1344
        %v1473 = vunpack.c.l.b16 %v1345
        %v1474 = vunpack.c.l.b16 %v1346
        %v1475 = vunpack.c.l.b16 %v1347
        %v1476 = vunpack.c.l.b16 %v1348
        %v1477 = vunpack.c.l.b16 %v1349
        %v1478 = vunpack.c.l.b16 %v1350
        %v1479 = vunpack.c.l.b16 %v1351
        %v1480 = vunpack.c.l.b16 %v1352
        %v1481 = vunpack.c.l.b16 %v1353
        %v1482 = vpack.c.b16 %v1419, %v1418
        %v1483 = vpack.c.b16 %v1421, %v1420
        %v1484 = vpack.c.b16 %v1423, %v1422
        %v1485 = vpack.c.b16 %v1425, %v1424
        %v1486 = vpack.c.b16 %v1427, %v1426
        %v1487 = vpack.c.b16 %v1429, %v1428
        %v1488 = vpack.c.b16 %v1431, %v1430
        %v1489 = vpack.c.b16 %v1433, %v1432
        %v1490 = vpack.c.b16 %v1435, %v1434
        %v1491 = vpack.c.b16 %v1437, %v1436
        %v1492 = vpack.c.b16 %v1439, %v1438
        %v1493 = vpack.c.b16 %v1441, %v1440
        %v1494 = vpack.c.b16 %v1443, %v1442
        %v1495 = vpack.c.b16 %v1445, %v1444
        %v1496 = vpack.c.b16 %v1447, %v1446
        %v1497 = vpack.c.b16 %v1449, %v1448
        %v1498 = vpack.c.b16 %v1451, %v1450
        %v1499 = vpack.c.b16 %v1453, %v1452
        %v1500 = vpack.c.b16 %v1455, %v1454
        %v1501 = vpack.c.b16 %v1457, %v1456
        %v1502 = vpack.c.b16 %v1459, %v1458
        %v1503 = vpack.c.b16 %v1461, %v1460
        %v1504 = vpack.c.b16 %v1463, %v1462
        %v1505 = vpack.c.b16 %v1465, %v1464
        %v1506 = vpack.c.b16 %v1467, %v1466
        %v1507 = vpack.c.b16 %v1469, %v1468
        %v1508 = vpack.c.b16 %v1471, %v1470
        %v1509 = vpack.c.b16 %v1473, %v1472
        %v1510 = vpack.c.b16 %v1475, %v1474
        %v1511 = vpack.c.b16 %v1477, %v1476
        %v1512 = vpack.c.b16 %v1479, %v1478
        %v1513 = vpack.c.b16 %v1481, %v1480
        %1546 = vmatprep.subr.bf16.mxu0 0
        %1547 = vmatpush1.bf16.msra.mxu0 %v1482
        %1548 = vmatprep.subr.bf16.mxu0 0
        %1549 = vmatpush1.bf16.msra.mxu0 %v1483
        %1550 = vmatprep.subr.bf16.mxu0 0
        %1551 = vmatpush1.bf16.msra.mxu0 %v1484
        %1552 = vmatprep.subr.bf16.mxu0 0
        %1553 = vmatpush1.bf16.msra.mxu0 %v1485
        %1554 = vmatprep.subr.bf16.mxu0 0
        %1555 = vmatpush1.bf16.msra.mxu0 %v1486
        %1556 = vmatprep.subr.bf16.mxu0 0
        %1557 = vmatpush1.bf16.msra.mxu0 %v1487
        %1558 = vmatprep.subr.bf16.mxu0 0
        %1559 = vmatpush1.bf16.msra.mxu0 %v1488
        %1560 = vmatprep.subr.bf16.mxu0 0
        %1561 = vmatpush1.bf16.msra.mxu0 %v1489
        %1562 = vmatprep.subr.bf16.mxu0 0
        %1563 = vmatpush1.bf16.msra.mxu0 %v1490
        %1564 = vmatprep.subr.bf16.mxu0 0
        %1565 = vmatpush1.bf16.msra.mxu0 %v1491
        %1566 = vmatprep.subr.bf16.mxu0 0
        %1567 = vmatpush1.bf16.msra.mxu0 %v1492
        %1568 = vmatprep.subr.bf16.mxu0 0
        %1569 = vmatpush1.bf16.msra.mxu0 %v1493
        %1570 = vmatprep.subr.bf16.mxu0 0
        %1571 = vmatpush1.bf16.msra.mxu0 %v1494
        %1572 = vmatprep.subr.bf16.mxu0 0
        %1573 = vmatpush1.bf16.msra.mxu0 %v1495
        %1574 = vmatprep.subr.bf16.mxu0 0
        %1575 = vmatpush1.bf16.msra.mxu0 %v1496
        %1576 = vmatprep.subr.bf16.mxu0 0
        %1577 = vmatpush1.bf16.msra.mxu0 %v1497
        %1578 = vmatprep.mubr.bf16.mxu0 %v454
        %1579 = vmatmul.mubr.bf16.gmra.mrb[0].mxu0 %v445
        %v1580 = vpop.f32.mrb[0].mxu0
        %v1581 = vadd.f32 %v530, %v1580
        %v1582 = vpop.f32.mrb[0].mxu0
        %v1583 = vpop.f32.mrb[0].mxu0
        %v1584 = vadd.f32 %v530, %v1583
        %v1585 = vpop.f32.mrb[0].mxu0
        %1586 = vmatprep.mubr.bf16.mxu0 %v455
        %1587 = vmatmul.mubr.bf16.gmra.mrb[0].mxu0 %v446
        %v1588 = vpop.f32.mrb[0].mxu0
        %v1589 = vadd.f32 %v530, %v1588
        %v1590 = vpop.f32.mrb[0].mxu0
        %v1591 = vpop.f32.mrb[0].mxu0
        %v1592 = vadd.f32 %v530, %v1591
        %v1593 = vpop.f32.mrb[0].mxu0
        %1594 = vmatprep.mubr.bf16.mxu0 %v456
        %1595 = vmatmul.mubr.bf16.gmra.mrb[0].mxu0 %v447
        %v1596 = vpop.f32.mrb[0].mxu0
        %v1597 = vadd.f32 %v530, %v1596
        %v1598 = vpop.f32.mrb[0].mxu0
        %v1599 = vpop.f32.mrb[0].mxu0
        %v1600 = vadd.f32 %v530, %v1599
        %v1601 = vpop.f32.mrb[0].mxu0
        %1602 = vmatprep.mubr.bf16.mxu0 %v457
        %1603 = vmatmul.mubr.bf16.gmra.mrb[0].mxu0 %v448
        %v1604 = vpop.f32.mrb[0].mxu0
        %v1605 = vadd.f32 %v530, %v1604
        %v1606 = vpop.f32.mrb[0].mxu0
        %v1607 = vpop.f32.mrb[0].mxu0
        %v1608 = vadd.f32 %v530, %v1607
        %v1609 = vpop.f32.mrb[0].mxu0
        %1610 = vdwg.mxu0
        %1611 = vmatprep.subr.bf16.mxu0 0
        %1612 = vmatpush1.bf16.msra.mxu0 %v1498
        %1613 = vmatprep.subr.bf16.mxu0 0
        %1614 = vmatpush1.bf16.msra.mxu0 %v1499
        %1615 = vmatprep.subr.bf16.mxu0 0
        %1616 = vmatpush1.bf16.msra.mxu0 %v1500
        %1617 = vmatprep.subr.bf16.mxu0 0
        %1618 = vmatpush1.bf16.msra.mxu0 %v1501
        %1619 = vmatprep.subr.bf16.mxu0 0
        %1620 = vmatpush1.bf16.msra.mxu0 %v1502
        %1621 = vmatprep.subr.bf16.mxu0 0
        %1622 = vmatpush1.bf16.msra.mxu0 %v1503
        %1623 = vmatprep.subr.bf16.mxu0 0
        %1624 = vmatpush1.bf16.msra.mxu0 %v1504
        %1625 = vmatprep.subr.bf16.mxu0 0
        %1626 = vmatpush1.bf16.msra.mxu0 %v1505
        %1627 = vmatprep.subr.bf16.mxu0 0
        %1628 = vmatpush1.bf16.msra.mxu0 %v1506
        %1629 = vmatprep.subr.bf16.mxu0 0
        %1630 = vmatpush1.bf16.msra.mxu0 %v1507
        %1631 = vmatprep.subr.bf16.mxu0 0
        %1632 = vmatpush1.bf16.msra.mxu0 %v1508
        %1633 = vmatprep.subr.bf16.mxu0 0
        %1634 = vmatpush1.bf16.msra.mxu0 %v1509
        %1635 = vmatprep.subr.bf16.mxu0 0
        %1636 = vmatpush1.bf16.msra.mxu0 %v1510
        %1637 = vmatprep.subr.bf16.mxu0 0
        %1638 = vmatpush1.bf16.msra.mxu0 %v1511
        %1639 = vmatprep.subr.bf16.mxu0 0
        %1640 = vmatpush1.bf16.msra.mxu0 %v1512
        %1641 = vmatprep.subr.bf16.mxu0 0
        %1642 = vmatpush1.bf16.msra.mxu0 %v1513
        %1643 = vmatprep.mubr.bf16.mxu0 %v437
        %1644 = vmatmul.mubr.bf16.gmra.mrb[0].mxu0 %v421
        %v1645 = vpop.f32.mrb[0].mxu0
        %v1646 = vadd.f32 %v1581, %v1645
        %v1647 = vpop.f32.mrb[0].mxu0
        %v1648 = vpop.f32.mrb[0].mxu0
        %v1649 = vadd.f32 %v1584, %v1648
        %v1650 = vpop.f32.mrb[0].mxu0
        %1651 = vmatprep.mubr.bf16.mxu0 %v438
        %1652 = vmatmul.mubr.bf16.gmra.mrb[0].mxu0 %v422
        %v1653 = vpop.f32.mrb[0].mxu0
        %v1654 = vadd.f32 %v1589, %v1653
        %v1655 = vpop.f32.mrb[0].mxu0
        %v1656 = vpop.f32.mrb[0].mxu0
        %v1657 = vadd.f32 %v1592, %v1656
        %v1658 = vpop.f32.mrb[0].mxu0
        %1659 = vmatprep.mubr.bf16.mxu0 %v439
        %1660 = vmatmul.mubr.bf16.gmra.mrb[0].mxu0 %v423
        %v1661 = vpop.f32.mrb[0].mxu0
        %v1662 = vadd.f32 %v1597, %v1661
        %v1663 = vpop.f32.mrb[0].mxu0
        %v1664 = vpop.f32.mrb[0].mxu0
        %v1665 = vadd.f32 %v1600, %v1664
        %v1666 = vpop.f32.mrb[0].mxu0
        %1667 = vmatprep.mubr.bf16.mxu0 %v1287
        %1668 = vmatmul.mubr.bf16.gmra.mrb[0].mxu0 %v1284
        %v1669 = vpop.f32.mrb[0].mxu0
        %v1670 = vadd.f32 %v1605, %v1669
        %v1671 = vpop.f32.mrb[0].mxu0
        %v1672 = vpop.f32.mrb[0].mxu0
        %v1673 = vadd.f32 %v1608, %v1672
        %v1674 = vpop.f32.mrb[0].mxu0
        %1675 = vdwg.mxu0
        %s1676 = scalar_lea.vmem %s178, 128 [#allocation5]
        %1677 = vst [vmem:[%s1676] sm:$0xff] %v1646
        %1678 = vst [vmem:[%s1676 + $0x8] sm:$0xff] %v1649
        %1679 = vst [vmem:[%s1676 + $0x10] sm:$0xff] %v1654
        %1680 = vst [vmem:[%s1676 + $0x18] sm:$0xff] %v1657
        %1681 = vst [vmem:[%s1676 + $0x20] sm:$0xff] %v1662
        %1682 = vst [vmem:[%s1676 + $0x28] sm:$0xff] %v1665
        %1683 = vst [vmem:[%s1676 + $0x30] sm:$0xff] %v1670
        %1684 = vst [vmem:[%s1676 + $0x38] sm:$0xff] %v1673
        %v1685 = vunpack.c.l.b16 %v411
        %v1686 = vpack.c.b16 %v1685, %v878
        %s1688 = scalar_lea.vmem [#allocation2], 768
        %v1689 = vld [vmem:[%s1688] sm:$0xf]
        %v1690 = vld [vmem:[%s1688 + $0x4] sm:$0xf]
        %v1691 = vld [vmem:[%s1688 + $0x8] sm:$0xf]
        %v1692 = vld [vmem:[%s1688 + $0xc] sm:$0xf]
        %v1693 = vld [vmem:[%s1688 + $0x10] sm:$0xf]
        %v1694 = vld [vmem:[%s1688 + $0x14] sm:$0xf]
        %v1695 = vld [vmem:[%s1688 + $0x18] sm:$0xf]
        %v1696 = vld [vmem:[%s1688 + $0x1c] sm:$0xf]
        %v1697 = vld [vmem:[%s1688 + $0x20] sm:$0xf]
        %v1698 = vld [vmem:[%s1688 + $0x24] sm:$0xf]
        %v1699 = vld [vmem:[%s1688 + $0x28] sm:$0xf]
        %v1700 = vld [vmem:[%s1688 + $0x2c] sm:$0xf]
        %v1701 = vld [vmem:[%s1688 + $0x30] sm:$0xf]
        %v1702 = vld [vmem:[%s1688 + $0x34] sm:$0xf]
        %v1703 = vld [vmem:[%s1688 + $0x38] sm:$0xf]
        %v1704 = vld [vmem:[%s1688 + $0x3c] sm:$0xf]
        %v1705 = vld [vmem:[%s1688 + $0x40] sm:$0xf]
        %v1706 = vld [vmem:[%s1688 + $0x44] sm:$0xf]
        %v1707 = vld [vmem:[%s1688 + $0x48] sm:$0xf]
        %v1708 = vld [vmem:[%s1688 + $0x4c] sm:$0xf]
        %v1709 = vld [vmem:[%s1688 + $0x50] sm:$0xf]
        %v1710 = vld [vmem:[%s1688 + $0x54] sm:$0xf]
        %v1711 = vld [vmem:[%s1688 + $0x58] sm:$0xf]
        %v1712 = vld [vmem:[%s1688 + $0x5c] sm:$0xf]
        %v1713 = vld [vmem:[%s1688 + $0x60] sm:$0xf]
        %v1714 = vld [vmem:[%s1688 + $0x64] sm:$0xf]
        %v1715 = vld [vmem:[%s1688 + $0x68] sm:$0xf]
        %v1716 = vld [vmem:[%s1688 + $0x6c] sm:$0xf]
        %v1717 = vld [vmem:[%s1688 + $0x70] sm:$0xf]
        %v1718 = vld [vmem:[%s1688 + $0x74] sm:$0xf]
        %v1719 = vld [vmem:[%s1688 + $0x78] sm:$0xf]
        %v1720 = vld [vmem:[%s1688 + $0x7c] sm:$0xf]
        %v1721 = vld [vmem:[%s1688 + $0x80] sm:$0xf]
        %v1722 = vld [vmem:[%s1688 + $0x84] sm:$0xf]
        %v1723 = vld [vmem:[%s1688 + $0x88] sm:$0xf]
        %v1724 = vld [vmem:[%s1688 + $0x8c] sm:$0xf]
        %v1725 = vld [vmem:[%s1688 + $0x90] sm:$0xf]
        %v1726 = vld [vmem:[%s1688 + $0x94] sm:$0xf]
        %v1727 = vld [vmem:[%s1688 + $0x98] sm:$0xf]
        %v1728 = vld [vmem:[%s1688 + $0x9c] sm:$0xf]
        %v1729 = vld [vmem:[%s1688 + $0xa0] sm:$0xf]
        %v1730 = vld [vmem:[%s1688 + $0xa4] sm:$0xf]
        %v1731 = vld [vmem:[%s1688 + $0xa8] sm:$0xf]
        %v1732 = vld [vmem:[%s1688 + $0xac] sm:$0xf]
        %v1733 = vld [vmem:[%s1688 + $0xb0] sm:$0xf]
        %v1734 = vld [vmem:[%s1688 + $0xb4] sm:$0xf]
        %v1735 = vld [vmem:[%s1688 + $0xb8] sm:$0xf]
        %v1736 = vld [vmem:[%s1688 + $0xbc] sm:$0xf]
        %v1737 = vld [vmem:[%s1688 + $0xc0] sm:$0xf]
        %v1738 = vld [vmem:[%s1688 + $0xc4] sm:$0xf]
        %v1739 = vld [vmem:[%s1688 + $0xc8] sm:$0xf]
        %v1740 = vld [vmem:[%s1688 + $0xcc] sm:$0xf]
        %v1741 = vld [vmem:[%s1688 + $0xd0] sm:$0xf]
        %v1742 = vld [vmem:[%s1688 + $0xd4] sm:$0xf]
        %v1743 = vld [vmem:[%s1688 + $0xd8] sm:$0xf]
        %v1744 = vld [vmem:[%s1688 + $0xdc] sm:$0xf]
        %v1745 = vld [vmem:[%s1688 + $0xe0] sm:$0xf]
        %v1746 = vld [vmem:[%s1688 + $0xe4] sm:$0xf]
        %v1747 = vld [vmem:[%s1688 + $0xe8] sm:$0xf]
        %v1748 = vld [vmem:[%s1688 + $0xec] sm:$0xf]
        %v1749 = vld [vmem:[%s1688 + $0xf0] sm:$0xf]
        %v1750 = vld [vmem:[%s1688 + $0xf4] sm:$0xf]
        %v1751 = vld [vmem:[%s1688 + $0xf8] sm:$0xf]
        %v1752 = vld [vmem:[%s1688 + $0xfc] sm:$0xf]
        %v1817 = vunpack.c.l.b16 %v1689
        %v1818 = vunpack.c.l.b16 %v1690
        %v1819 = vunpack.c.l.b16 %v1691
        %v1820 = vunpack.c.l.b16 %v1692
        %v1821 = vunpack.c.l.b16 %v1693
        %v1822 = vunpack.c.l.b16 %v1694
        %v1823 = vunpack.c.l.b16 %v1695
        %v1824 = vunpack.c.l.b16 %v1696
        %v1825 = vunpack.c.l.b16 %v1697
        %v1826 = vunpack.c.l.b16 %v1698
        %v1827 = vunpack.c.l.b16 %v1699
        %v1828 = vunpack.c.l.b16 %v1700
        %v1829 = vunpack.c.l.b16 %v1701
        %v1830 = vunpack.c.l.b16 %v1702
        %v1831 = vunpack.c.l.b16 %v1703
        %v1832 = vunpack.c.l.b16 %v1704
        %v1833 = vunpack.c.l.b16 %v1705
        %v1834 = vunpack.c.l.b16 %v1706
        %v1835 = vunpack.c.l.b16 %v1707
        %v1836 = vunpack.c.l.b16 %v1708
        %v1837 = vunpack.c.l.b16 %v1709
        %v1838 = vunpack.c.l.b16 %v1710
        %v1839 = vunpack.c.l.b16 %v1711
        %v1840 = vunpack.c.l.b16 %v1712
        %v1841 = vunpack.c.l.b16 %v1713
        %v1842 = vunpack.c.l.b16 %v1714
        %v1843 = vunpack.c.l.b16 %v1715
        %v1844 = vunpack.c.l.b16 %v1716
        %v1845 = vunpack.c.l.b16 %v1717
        %v1846 = vunpack.c.l.b16 %v1718
        %v1847 = vunpack.c.l.b16 %v1719
        %v1848 = vunpack.c.l.b16 %v1720
        %v1849 = vunpack.c.l.b16 %v1721
        %v1850 = vunpack.c.l.b16 %v1722
        %v1851 = vunpack.c.l.b16 %v1723
        %v1852 = vunpack.c.l.b16 %v1724
        %v1853 = vunpack.c.l.b16 %v1725
        %v1854 = vunpack.c.l.b16 %v1726
        %v1855 = vunpack.c.l.b16 %v1727
        %v1856 = vunpack.c.l.b16 %v1728
        %v1857 = vunpack.c.l.b16 %v1729
        %v1858 = vunpack.c.l.b16 %v1730
        %v1859 = vunpack.c.l.b16 %v1731
        %v1860 = vunpack.c.l.b16 %v1732
        %v1861 = vunpack.c.l.b16 %v1733
        %v1862 = vunpack.c.l.b16 %v1734
        %v1863 = vunpack.c.l.b16 %v1735
        %v1864 = vunpack.c.l.b16 %v1736
        %v1865 = vunpack.c.l.b16 %v1737
        %v1866 = vunpack.c.l.b16 %v1738
        %v1867 = vunpack.c.l.b16 %v1739
        %v1868 = vunpack.c.l.b16 %v1740
        %v1869 = vunpack.c.l.b16 %v1741
        %v1870 = vunpack.c.l.b16 %v1742
        %v1871 = vunpack.c.l.b16 %v1743
        %v1872 = vunpack.c.l.b16 %v1744
        %v1873 = vunpack.c.l.b16 %v1745
        %v1874 = vunpack.c.l.b16 %v1746
        %v1875 = vunpack.c.l.b16 %v1747
        %v1876 = vunpack.c.l.b16 %v1748
        %v1877 = vunpack.c.l.b16 %v1749
        %v1878 = vunpack.c.l.b16 %v1750
        %v1879 = vunpack.c.l.b16 %v1751
        %v1880 = vunpack.c.l.b16 %v1752
        %v1881 = vpack.c.b16 %v1818, %v1817
        %v1882 = vpack.c.b16 %v1820, %v1819
        %v1883 = vpack.c.b16 %v1822, %v1821
        %v1884 = vpack.c.b16 %v1824, %v1823
        %v1885 = vpack.c.b16 %v1826, %v1825
        %v1886 = vpack.c.b16 %v1828, %v1827
        %v1887 = vpack.c.b16 %v1830, %v1829
        %v1888 = vpack.c.b16 %v1832, %v1831
        %v1889 = vpack.c.b16 %v1834, %v1833
        %v1890 = vpack.c.b16 %v1836, %v1835
        %v1891 = vpack.c.b16 %v1838, %v1837
        %v1892 = vpack.c.b16 %v1840, %v1839
        %v1893 = vpack.c.b16 %v1842, %v1841
        %v1894 = vpack.c.b16 %v1844, %v1843
        %v1895 = vpack.c.b16 %v1846, %v1845
        %v1896 = vpack.c.b16 %v1848, %v1847
        %v1897 = vpack.c.b16 %v1850, %v1849
        %v1898 = vpack.c.b16 %v1852, %v1851
        %v1899 = vpack.c.b16 %v1854, %v1853
        %v1900 = vpack.c.b16 %v1856, %v1855
        %v1901 = vpack.c.b16 %v1858, %v1857
        %v1902 = vpack.c.b16 %v1860, %v1859
        %v1903 = vpack.c.b16 %v1862, %v1861
        %v1904 = vpack.c.b16 %v1864, %v1863
        %v1905 = vpack.c.b16 %v1866, %v1865
        %v1906 = vpack.c.b16 %v1868, %v1867
        %v1907 = vpack.c.b16 %v1870, %v1869
        %v1908 = vpack.c.b16 %v1872, %v1871
        %v1909 = vpack.c.b16 %v1874, %v1873
        %v1910 = vpack.c.b16 %v1876, %v1875
        %v1911 = vpack.c.b16 %v1878, %v1877
        %v1912 = vpack.c.b16 %v1880, %v1879
        %1945 = vmatprep.subr.bf16.mxu0 0
        %1946 = vmatpush1.bf16.msra.mxu0 %v1881
        %1947 = vmatprep.subr.bf16.mxu0 0
        %1948 = vmatpush1.bf16.msra.mxu0 %v1882
        %1949 = vmatprep.subr.bf16.mxu0 0
        %1950 = vmatpush1.bf16.msra.mxu0 %v1883
        %1951 = vmatprep.subr.bf16.mxu0 0
        %1952 = vmatpush1.bf16.msra.mxu0 %v1884
        %1953 = vmatprep.subr.bf16.mxu0 0
        %1954 = vmatpush1.bf16.msra.mxu0 %v1885
        %1955 = vmatprep.subr.bf16.mxu0 0
        %1956 = vmatpush1.bf16.msra.mxu0 %v1886
        %1957 = vmatprep.subr.bf16.mxu0 0
        %1958 = vmatpush1.bf16.msra.mxu0 %v1887
        %1959 = vmatprep.subr.bf16.mxu0 0
        %1960 = vmatpush1.bf16.msra.mxu0 %v1888
        %1961 = vmatprep.subr.bf16.mxu0 0
        %1962 = vmatpush1.bf16.msra.mxu0 %v1889
        %1963 = vmatprep.subr.bf16.mxu0 0
        %1964 = vmatpush1.bf16.msra.mxu0 %v1890
        %1965 = vmatprep.subr.bf16.mxu0 0
        %1966 = vmatpush1.bf16.msra.mxu0 %v1891
        %1967 = vmatprep.subr.bf16.mxu0 0
        %1968 = vmatpush1.bf16.msra.mxu0 %v1892
        %1969 = vmatprep.subr.bf16.mxu0 0
        %1970 = vmatpush1.bf16.msra.mxu0 %v1893
        %1971 = vmatprep.subr.bf16.mxu0 0
        %1972 = vmatpush1.bf16.msra.mxu0 %v1894
        %1973 = vmatprep.subr.bf16.mxu0 0
        %1974 = vmatpush1.bf16.msra.mxu0 %v1895
        %1975 = vmatprep.subr.bf16.mxu0 0
        %1976 = vmatpush1.bf16.msra.mxu0 %v1896
        %1977 = vmatprep.mubr.bf16.mxu0 %v879
        %1978 = vmatmul.mubr.bf16.gmra.mrb[0].mxu0 %v454
        %v1979 = vpop.f32.mrb[0].mxu0
        %v1980 = vadd.f32 %v530, %v1979
        %v1981 = vpop.f32.mrb[0].mxu0
        %v1982 = vpop.f32.mrb[0].mxu0
        %v1983 = vadd.f32 %v530, %v1982
        %v1984 = vpop.f32.mrb[0].mxu0
        %1985 = vmatprep.mubr.bf16.mxu0 %v880
        %1986 = vmatmul.mubr.bf16.gmra.mrb[0].mxu0 %v455
        %v1987 = vpop.f32.mrb[0].mxu0
        %v1988 = vadd.f32 %v530, %v1987
        %v1989 = vpop.f32.mrb[0].mxu0
        %v1990 = vpop.f32.mrb[0].mxu0
        %v1991 = vadd.f32 %v530, %v1990
        %v1992 = vpop.f32.mrb[0].mxu0
        %1993 = vmatprep.mubr.bf16.mxu0 %v881
        %1994 = vmatmul.mubr.bf16.gmra.mrb[0].mxu0 %v456
        %v1995 = vpop.f32.mrb[0].mxu0
        %v1996 = vadd.f32 %v530, %v1995
        %v1997 = vpop.f32.mrb[0].mxu0
        %v1998 = vpop.f32.mrb[0].mxu0
        %v1999 = vadd.f32 %v530, %v1998
        %v2000 = vpop.f32.mrb[0].mxu0
        %2001 = vmatprep.mubr.bf16.mxu0 %v882
        %2002 = vmatmul.mubr.bf16.gmra.mrb[0].mxu0 %v457
        %v2003 = vpop.f32.mrb[0].mxu0
        %v2004 = vadd.f32 %v530, %v2003
        %v2005 = vpop.f32.mrb[0].mxu0
        %v2006 = vpop.f32.mrb[0].mxu0
        %v2007 = vadd.f32 %v530, %v2006
        %v2008 = vpop.f32.mrb[0].mxu0
        %2009 = vdwg.mxu0
        %2010 = vmatprep.subr.bf16.mxu0 0
        %2011 = vmatpush1.bf16.msra.mxu0 %v1897
        %2012 = vmatprep.subr.bf16.mxu0 0
        %2013 = vmatpush1.bf16.msra.mxu0 %v1898
        %2014 = vmatprep.subr.bf16.mxu0 0
        %2015 = vmatpush1.bf16.msra.mxu0 %v1899
        %2016 = vmatprep.subr.bf16.mxu0 0
        %2017 = vmatpush1.bf16.msra.mxu0 %v1900
        %2018 = vmatprep.subr.bf16.mxu0 0
        %2019 = vmatpush1.bf16.msra.mxu0 %v1901
        %2020 = vmatprep.subr.bf16.mxu0 0
        %2021 = vmatpush1.bf16.msra.mxu0 %v1902
        %2022 = vmatprep.subr.bf16.mxu0 0
        %2023 = vmatpush1.bf16.msra.mxu0 %v1903
        %2024 = vmatprep.subr.bf16.mxu0 0
        %2025 = vmatpush1.bf16.msra.mxu0 %v1904
        %2026 = vmatprep.subr.bf16.mxu0 0
        %2027 = vmatpush1.bf16.msra.mxu0 %v1905
        %2028 = vmatprep.subr.bf16.mxu0 0
        %2029 = vmatpush1.bf16.msra.mxu0 %v1906
        %2030 = vmatprep.subr.bf16.mxu0 0
        %2031 = vmatpush1.bf16.msra.mxu0 %v1907
        %2032 = vmatprep.subr.bf16.mxu0 0
        %2033 = vmatpush1.bf16.msra.mxu0 %v1908
        %2034 = vmatprep.subr.bf16.mxu0 0
        %2035 = vmatpush1.bf16.msra.mxu0 %v1909
        %2036 = vmatprep.subr.bf16.mxu0 0
        %2037 = vmatpush1.bf16.msra.mxu0 %v1910
        %2038 = vmatprep.subr.bf16.mxu0 0
        %2039 = vmatpush1.bf16.msra.mxu0 %v1911
        %2040 = vmatprep.subr.bf16.mxu0 0
        %2041 = vmatpush1.bf16.msra.mxu0 %v1912
        %2042 = vmatprep.mubr.bf16.mxu0 %v871
        %2043 = vmatmul.mubr.bf16.gmra.mrb[0].mxu0 %v437
        %v2044 = vpop.f32.mrb[0].mxu0
        %v2045 = vadd.f32 %v1980, %v2044
        %v2046 = vpop.f32.mrb[0].mxu0
        %v2047 = vpop.f32.mrb[0].mxu0
        %v2048 = vadd.f32 %v1983, %v2047
        %v2049 = vpop.f32.mrb[0].mxu0
        %2050 = vmatprep.mubr.bf16.mxu0 %v872
        %2051 = vmatmul.mubr.bf16.gmra.mrb[0].mxu0 %v438
        %v2052 = vpop.f32.mrb[0].mxu0
        %v2053 = vadd.f32 %v1988, %v2052
        %v2054 = vpop.f32.mrb[0].mxu0
        %v2055 = vpop.f32.mrb[0].mxu0
        %v2056 = vadd.f32 %v1991, %v2055
        %v2057 = vpop.f32.mrb[0].mxu0
        %2058 = vmatprep.mubr.bf16.mxu0 %v873
        %2059 = vmatmul.mubr.bf16.gmra.mrb[0].mxu0 %v439
        %v2060 = vpop.f32.mrb[0].mxu0
        %v2061 = vadd.f32 %v1996, %v2060
        %v2062 = vpop.f32.mrb[0].mxu0
        %v2063 = vpop.f32.mrb[0].mxu0
        %v2064 = vadd.f32 %v1999, %v2063
        %v2065 = vpop.f32.mrb[0].mxu0
        %2066 = vmatprep.mubr.bf16.mxu0 %v1686
        %2067 = vmatmul.mubr.bf16.gmra.mrb[0].mxu0 %v1287
        %v2068 = vpop.f32.mrb[0].mxu0
        %v2069 = vadd.f32 %v2004, %v2068
        %v2070 = vpop.f32.mrb[0].mxu0
        %v2071 = vpop.f32.mrb[0].mxu0
        %v2072 = vadd.f32 %v2007, %v2071
        %v2073 = vpop.f32.mrb[0].mxu0
        %2074 = vdwg.mxu0
        %s2075 = scalar_lea.vmem %s178, 192 [#allocation5]
        %2076 = vst [vmem:[%s2075] sm:$0xff] %v2045
        %2077 = vst [vmem:[%s2075 + $0x8] sm:$0xff] %v2048
        %2078 = vst [vmem:[%s2075 + $0x10] sm:$0xff] %v2053
        %2079 = vst [vmem:[%s2075 + $0x18] sm:$0xff] %v2056
        %2080 = vst [vmem:[%s2075 + $0x20] sm:$0xff] %v2061
        %2081 = vst [vmem:[%s2075 + $0x28] sm:$0xff] %v2064
        %2082 = vst [vmem:[%s2075 + $0x30] sm:$0xff] %v2069
        %2083 = vst [vmem:[%s2075 + $0x38] sm:$0xff] %v2072
        %s2084 = sand.u32 %s94, 1
        %s2085 = scalar_lea.sflag [#allocation4], %s2084
        %s2086 = sand.u32 %s94, 1
        %s2087 = smul.addr %s2086, 256
        %s2088 = scalar_lea.vmem [#allocation5], %s2087
        // Predicated region
        $region37: #{tpu_custom_call.1} parent=31 // pred_check
          %p2089 = pneg %p104
        $region38: #{tpu_custom_call.1} parent=31 // pred_check_branch
          %2091 = sbr.rel (%p2089) target = $region40
        $region39: #{tpu_custom_call.1} parent=31 // pred_region
          %s2093 = ssub.s32 4096, 4096
          %2094 = vsyncadd %s2085, %s2093
          %s2095 = smul.addr %s18, 32
          %s2096 = smul.addr %s2095, 128
          %s2097 = scalar_lea.hbm %s3, %s2096
          %s2098 = sshll.u32 %s2088, 4
          %s2099 = int_to_ptr.vmem [resolvable:$true] %s2098
          %2104 = dma.vmem_to_hbm [thread:$0]  %s2099, 4096, %s2097, %s2085, 128, 128, 8
        $region40: #{tpu_custom_call.1} parent=31 // pred_fallthru
          _
      $region32: #{tpu_custom_call.1} parent=5 // pred_fallthru
        _
      %p2105 = scmp.le.s32.totalorder 2, %s13
      // Predicated region
      $region41: #{tpu_custom_call.1} parent=5 // pred_check
        %p2106 = pneg %p2105
      $region42: #{tpu_custom_call.1} parent=5 // pred_check_branch
        %2108 = sbr.rel (%p2106) target = $region44
      $region43: #{tpu_custom_call.1} parent=5 // pred_region
        %s2109 = ssub.s32 %s13, 2
        // Predicated region
        $region45: #{tpu_custom_call.1} parent=43 // pred_check
          %p2110 = pneg %p110
        $region46: #{tpu_custom_call.1} parent=43 // pred_check_branch
          %2112 = sbr.rel (%p2110) target = $region48
        $region47: #{tpu_custom_call.1} parent=43 // pred_region
          %s2113 = sand.u32 %s95, 1
          %s2114 = scalar_lea.sflag [#allocation4], %s2113
          %s2115 = sand.u32 %s95, 1
          %s2116 = smul.addr %s2115, 256
          %s2117 = scalar_lea.vmem [#allocation5], %s2116
          %2118 = dma.done %s2114, 4096
        $region48: #{tpu_custom_call.1} parent=43 // pred_fallthru
          _
      $region44: #{tpu_custom_call.1} parent=5 // pred_fallthru
        _
    $region6: #{tpu_custom_call.1} parent=1 // loop_footer
      %s17 = sadd.s32 1, %s13
    $region7: #{tpu_custom_call.1} parent=1 // loop_footer_branch
      %12 = sbr.rel target = $region3
    $region8: #{tpu_custom_call.1} parent=1 // loop_exit
      _
    %2119 = vsyncpa [#allocation3], 1
    %s2120 = scalar_lea.sflag [#allocation3], 1
    %2121 = vsyncpa %s2120, 1
    %2122 = vsyncpa [#allocation4], 1
    %s2123 = scalar_lea.sflag [#allocation4], 1
    %2124 = vsyncpa %s2123, 1

</llo_original>
